<compile_context>
chip_gen: v5e
topology: v5e:2x2
jax: 0.10.0
libtpu: 0.0.40
codegen_flags: <defaults>
</compile_context>

<pallas_src>
import numpy as np
import jax
import jax.numpy as jnp
from jax import lax
from jax.experimental import pallas as pl
from jax.experimental.pallas import tpu as pltpu

# Hyperparameters implied by the module definition.
CIN = 352                                  # input sequence length (cin)
CH = 4                                     # conv channels (ch)
K = 7                                      # kernel size
STRIDE = 2
PAD = 3
L1 = (CIN + 2 * PAD - K) // STRIDE + 1     # 176
L2 = (L1 + 2 * PAD - K) // STRIDE + 1      # 88
H1F = CH * L1                              # 704 (flattened conv1 output)
FEAT = CH * L2                             # 352 == 88 * 4 (Linear in_features)


def _round_up(n, m):
    return ((n + m - 1) // m) * m


def _pick_batch_tile(b):
    """MXU-friendly batch tile: big tiles for big batches (amortize ~0.35us/step),
    a minimal 8-row (one sublane group) tile for tiny batches."""
    if b >= 2048:
        return 1024
    if b >= 512:
        return 512
    if b >= 256:
        return 256
    return _round_up(max(b, 1), 8)


def conv1d_as_matrix(w, l_in, l_out, stride, pad):
    """Turn a Conv1d weight (C_out, C_in, K) into a banded dense matrix mapping
    channel-major-flattened input (C_in*l_in,) -> channel-major-flattened
    output (C_out*l_out,). Zero padding is folded in (out-of-range taps = 0)."""
    c_out, c_in, k = w.shape
    m = np.zeros((c_in * l_in, c_out * l_out), dtype=np.float32)
    for co in range(c_out):
        for ci in range(c_in):
            for kk in range(k):
                for t in range(l_out):
                    p = stride * t + kk - pad
                    if 0 <= p < l_in:
                        m[ci * l_in + p, co * l_out + t] = w[co, ci, kk]
    return m


# Kernel: x tile is (B_TILE, 352) bf16; conv activations are kept channel-major
# flattened, i.e. exactly torch's .reshape([B, -1]) of an (B, C, L) tensor, so the
# final classifier sees identical feature ordering.
def cnn_kernel(x_ref, m1_ref, b1_ref, m2_ref, b2_ref, wc_ref, bc_ref, out_ref):
    x = x_ref[...]                                                          # (bt, 352) bf16
    h1 = jnp.dot(x, m1_ref[...], preferred_element_type=jnp.float32)        # MXU bf16 -> f32
    h1 = jnp.maximum(h1 + b1_ref[...], 0.0)                                 # (bt, 704) f32
    h2 = jnp.dot(h1.astype(jnp.bfloat16), m2_ref[...],
                 preferred_element_type=jnp.float32)                        # MXU bf16 -> f32
    h2 = jnp.maximum(h2 + b2_ref[...], 0.0)                                 # (bt, 352) f32
    # Classifier: VPU multiply + XLU lane reduction (avoids an N=1 MXU pass).
    out_ref[...] = jnp.sum(h2 * wc_ref[...], axis=-1, keepdims=True) + bc_ref[...]


def cnn_classifier_forward(x, packed_params, *, batch_tile=None):
    m1, b1b, m2, b2b, wcls, bcls = packed_params
    B = x.shape[0]
    bt = batch_tile or _pick_batch_tile(B)
    B_pad = _round_up(B, bt)

    xs = x.astype(jnp.bfloat16)
    if B_pad != B:
        xs = jnp.pad(xs, ((0, B_pad - B), (0, 0)))          # padded rows sliced off below

    grid = (B_pad // bt,)

    # Weights/biases: constant index_map -> loaded once, stay resident in VMEM.
    const = lambda shape: pl.BlockSpec(shape, lambda i: (0, 0))
    in_specs = [
        pl.BlockSpec((bt, CIN), lambda i: (i, 0)),           # x stream (double-buffered)
        const((CIN, H1F)),                                   # m1 (bf16, 495 KiB)
        const((1, H1F)),                                     # conv1 bias (channel-major)
        const((H1F, FEAT)),                                  # m2 (bf16, 495 KiB)
        const((1, FEAT)),                                    # conv2 bias
        const((1, FEAT)),                                    # classifier weight (lane-major)
        const((1, 1)),                                       # classifier bias
    ]
    out_spec = pl.BlockSpec((bt, 1), lambda i: (i, 0))

    weight_bytes = (m1.size * 2 + m2.size * 2
                    + (b1b.size + b2b.size + wcls.size + bcls.size) * 4)
    cost = pl.CostEstimate(
        flops=B_pad * (2 * CIN * H1F + 2 * H1F * FEAT + 2 * FEAT),
        transcendentals=0,
        bytes_accessed=weight_bytes + B_pad * CIN * 2 + B_pad * 4,
    )

    out = pl.pallas_call(
        cnn_kernel,
        out_shape=jax.ShapeDtypeStruct((B_pad, 1), jnp.float32),
        grid=grid,
        in_specs=in_specs,
        out_specs=out_spec,
        compiler_params=pltpu.CompilerParams(
            dimension_semantics=("parallel",),               # shards batch across TCs on v7x
            vmem_limit_bytes=32 * 1024 * 1024,               # explicit; well under v7x's 64 MiB
        ),
        cost_estimate=cost,
    )(xs, m1, b1b, m2, b2b, wcls, bcls)
    return out[:B]


def init_params(key):
    """Deterministic PyTorch-style uniform(-1/sqrt(fan_in), 1/sqrt(fan_in)) init."""
    k1, k2, k3, k4, k5, k6 = jax.random.split(key, 6)

    def unif(k, shape, fan_in):
        b = 1.0 / np.sqrt(fan_in)
        return jax.random.uniform(k, shape, jnp.float32, -b, b)

    w1 = unif(k1, (CH, 1, K), 1 * K)       # Conv1d(1, ch, 7)
    b1 = unif(k2, (CH,), 1 * K)
    w2 = unif(k3, (CH, CH, K), CH * K)     # Conv1d(ch, ch, 7)
    b2 = unif(k4, (CH,), CH * K)
    wclf = unif(k5, (1, FEAT), FEAT)       # Linear(352, 1)
    bclf = unif(k6, (1,), FEAT)
    return w1, b1, w2, b2, wclf, bclf


def pack_params(w1, b1, w2, b2, wclf, bclf):
    m1 = jnp.asarray(conv1d_as_matrix(np.asarray(w1), CIN, L1, STRIDE, PAD),
                     dtype=jnp.bfloat16)                     # (352, 704)
    m2 = jnp.asarray(conv1d_as_matrix(np.asarray(w2), L1, L2, STRIDE, PAD),
                     dtype=jnp.bfloat16)                     # (704, 352)
    b1b = jnp.repeat(b1, L1)[None, :].astype(jnp.float32)    # (1, 704) channel-major bias
    b2b = jnp.repeat(b2, L2)[None, :].astype(jnp.float32)    # (1, 352)
    wcls = wclf.astype(jnp.float32)                          # (1, 352) lane-major for VPU+reduce
    bcls = bclf[None, :].astype(jnp.float32)                 # (1, 1)
    return m1, b1b, m2, b2b, wcls, bcls


def ref_forward(x, w1, b1, w2, b2, wclf, bclf):
    """Pure-JAX f32 reference with the same semantics as the PyTorch forward."""
    dn = ("NCH", "OIH", "NCH")
    h = x[:, None, :]                                                     # (B, 1, L)
    h = lax.conv_general_dilated(h, w1, (STRIDE,), [(PAD, PAD)], dimension_numbers=dn)
    h = jnp.maximum(h + b1[None, :, None], 0.0)
    h = lax.conv_general_dilated(h, w2, (STRIDE,), [(PAD, PAD)], dimension_numbers=dn)
    h = jnp.maximum(h + b2[None, :, None], 0.0)
    h = h.reshape(x.shape[0], -1)                                         # (B, 4*88)
    return h @ wclf.T + bclf[None, :]                                     # (B, 1)


if __name__ == "__main__":
    key = jax.random.PRNGKey(0)
    kx, kx2, kp = jax.random.split(key, 3)

    raw = init_params(kp)
    packed = pack_params(*raw)

    # Tolerance is 2e-2 because weights/activations of the two conv matmuls are bf16
    # (f32 accumulation); observed error is ~1e-3 absolute on O(0.1) outputs.
    TOL = 2e-2

    # Small canonical case (B=2).
    B = 2
    x = jax.random.normal(kx, (B, CIN), jnp.float32)
    out = jax.block_until_ready(cnn_classifier_forward(x, packed))
    ref = ref_forward(x, *raw)
    assert out.shape == (B, 1), out.shape
    if not np.allclose(np.asarray(out), np.asarray(ref), rtol=TOL, atol=TOL):
        raise AssertionError("Pallas kernel output does not match JAX reference (B=2)")

    # Larger ragged batch exercises the batch grid + padding path (300 -> tile 256, 2 grid steps).
    B2 = 300
    x2 = jax.random.normal(kx2, (B2, CIN), jnp.float32)
    out2 = jax.block_until_ready(cnn_classifier_forward(x2, packed))
    ref2 = ref_forward(x2, *raw)
    assert out2.shape == (B2, 1), out2.shape
    if not np.allclose(np.asarray(out2), np.asarray(ref2), rtol=TOL, atol=TOL):
        raise AssertionError("Pallas kernel output does not match JAX reference (B=300)")

    print("KERNEL_OK")
</pallas_src>

<mosaic_0001>
module attributes {stable_mosaic.version = 11 : i64} {
  func.func @cnn_kernel(%arg0: i32, %arg1: memref<8x352xbf16, #tpu.memory_space<vmem>>, %arg2: memref<352x704xbf16, #tpu.memory_space<vmem>>, %arg3: memref<1x704xf32, #tpu.memory_space<vmem>>, %arg4: memref<704x352xbf16, #tpu.memory_space<vmem>>, %arg5: memref<1x352xf32, #tpu.memory_space<vmem>>, %arg6: memref<1x352xf32, #tpu.memory_space<vmem>>, %arg7: memref<1x1xf32, #tpu.memory_space<vmem>>, %arg8: memref<8x1xf32, #tpu.memory_space<vmem>>) attributes {dimension_semantics = [#tpu.dimension_semantics<parallel>], iteration_bounds = array<i64: 1>, scalar_prefetch = 0 : i64, scratch_operands = 0 : i64, tpu.core_type = #tpu.core_type<tc>, window_params = [{transform_indices = @transform_0, window_bounds = array<i64: 8, 352>}, {pipeline_mode = #tpu.pipeline_mode<synchronous>, transform_indices = @transform_1, window_bounds = array<i64: 352, 704>}, {pipeline_mode = #tpu.pipeline_mode<synchronous>, transform_indices = @transform_2, window_bounds = array<i64: 1, 704>}, {pipeline_mode = #tpu.pipeline_mode<synchronous>, transform_indices = @transform_3, window_bounds = array<i64: 704, 352>}, {pipeline_mode = #tpu.pipeline_mode<synchronous>, transform_indices = @transform_4, window_bounds = array<i64: 1, 352>}, {pipeline_mode = #tpu.pipeline_mode<synchronous>, transform_indices = @transform_5, window_bounds = array<i64: 1, 352>}, {pipeline_mode = #tpu.pipeline_mode<synchronous>, transform_indices = @transform_6, window_bounds = array<i64: 1, 1>}, {transform_indices = @transform_7, window_bounds = array<i64: 8, 1>}]} {
    %c0 = arith.constant 0 : index
    %c0_0 = arith.constant 0 : index
    %0 = vector.load %arg1[%c0, %c0_0] : memref<8x352xbf16, #tpu.memory_space<vmem>>, vector<8x352xbf16>
    %c0_1 = arith.constant 0 : index
    %c0_2 = arith.constant 0 : index
    %1 = vector.load %arg2[%c0_1, %c0_2] : memref<352x704xbf16, #tpu.memory_space<vmem>>, vector<352x704xbf16>
    %cst = arith.constant dense<0.000000e+00> : vector<8x704xf32>
    %2 = tpu.matmul %0, %1, %cst {dimension_numbers = #tpu.dot_dimension_numbers<[1], [0], [0], [1], [0, 0, 1, 1], [], []>} : vector<8x352xbf16>, vector<352x704xbf16>, vector<8x704xf32> -> vector<8x704xf32>
    %c0_3 = arith.constant 0 : index
    %c0_4 = arith.constant 0 : index
    %3 = vector.load %arg3[%c0_3, %c0_4] : memref<1x704xf32, #tpu.memory_space<vmem>>, vector<1x704xf32>
    %4 = vector.broadcast %3 : vector<1x704xf32> to vector<8x704xf32>
    %5 = arith.addf %2, %4 : vector<8x704xf32>
    %cst_5 = arith.constant 0.000000e+00 : f32
    %6 = vector.broadcast %cst_5 : f32 to vector<8x704xf32>
    %7 = arith.maximumf %5, %6 : vector<8x704xf32>
    %8 = arith.truncf %7 : vector<8x704xf32> to vector<8x704xbf16>
    %c0_6 = arith.constant 0 : index
    %c0_7 = arith.constant 0 : index
    %9 = vector.load %arg4[%c0_6, %c0_7] : memref<704x352xbf16, #tpu.memory_space<vmem>>, vector<704x352xbf16>
    %cst_8 = arith.constant dense<0.000000e+00> : vector<8x352xf32>
    %10 = tpu.matmul %8, %9, %cst_8 {dimension_numbers = #tpu.dot_dimension_numbers<[1], [0], [0], [1], [0, 0, 1, 1], [], []>} : vector<8x704xbf16>, vector<704x352xbf16>, vector<8x352xf32> -> vector<8x352xf32>
    %c0_9 = arith.constant 0 : index
    %c0_10 = arith.constant 0 : index
    %11 = vector.load %arg5[%c0_9, %c0_10] : memref<1x352xf32, #tpu.memory_space<vmem>>, vector<1x352xf32>
    %12 = vector.broadcast %11 : vector<1x352xf32> to vector<8x352xf32>
    %13 = arith.addf %10, %12 : vector<8x352xf32>
    %cst_11 = arith.constant 0.000000e+00 : f32
    %14 = vector.broadcast %cst_11 : f32 to vector<8x352xf32>
    %15 = arith.maximumf %13, %14 : vector<8x352xf32>
    %c0_12 = arith.constant 0 : index
    %c0_13 = arith.constant 0 : index
    %16 = vector.load %arg6[%c0_12, %c0_13] : memref<1x352xf32, #tpu.memory_space<vmem>>, vector<1x352xf32>
    %17 = vector.broadcast %16 : vector<1x352xf32> to vector<8x352xf32>
    %18 = arith.mulf %15, %17 : vector<8x352xf32>
    %cst_14 = arith.constant dense<0.000000e+00> : vector<8xf32>
    %19 = vector.multi_reduction <add>, %18, %cst_14 [1] : vector<8x352xf32> to vector<8xf32>
    %20 = vector.shape_cast %19 : vector<8xf32> to vector<8x1xf32>
    %c0_15 = arith.constant 0 : index
    %c0_16 = arith.constant 0 : index
    %21 = vector.load %arg7[%c0_15, %c0_16] : memref<1x1xf32, #tpu.memory_space<vmem>>, vector<1x1xf32>
    %22 = vector.broadcast %21 : vector<1x1xf32> to vector<8x1xf32>
    %23 = arith.addf %20, %22 : vector<8x1xf32>
    %c0_17 = arith.constant 0 : index
    %c0_18 = arith.constant 0 : index
    %24 = vector.load %arg8[%c0_17, %c0_18] : memref<8x1xf32, #tpu.memory_space<vmem>>, vector<8x1xf32>
    tpu.vector_store %arg8[%c0_17, %c0_18], %23 {strides = array<i32>} : memref<8x1xf32, #tpu.memory_space<vmem>>, vector<8x1xf32>,
    return
  }
  func.func @transform_0(%arg0: i32) -> (i32, i32) {
    %c0_i32 = arith.constant 0 : i32
    %c0_i32_0 = arith.constant 0 : i32
    return %arg0, %c0_i32 : i32, i32
  }
  func.func @transform_1(%arg0: i32) -> (i32, i32) {
    %c0_i32 = arith.constant 0 : i32
    %c0_i32_0 = arith.constant 0 : i32
    %c0_i32_1 = arith.constant 0 : i32
    return %c0_i32, %c0_i32_0 : i32, i32
  }
  func.func @transform_2(%arg0: i32) -> (i32, i32) {
    %c0_i32 = arith.constant 0 : i32
    %c0_i32_0 = arith.constant 0 : i32
    %c0_i32_1 = arith.constant 0 : i32
    return %c0_i32, %c0_i32_0 : i32, i32
  }
  func.func @transform_3(%arg0: i32) -> (i32, i32) {
    %c0_i32 = arith.constant 0 : i32
    %c0_i32_0 = arith.constant 0 : i32
    %c0_i32_1 = arith.constant 0 : i32
    return %c0_i32, %c0_i32_0 : i32, i32
  }
  func.func @transform_4(%arg0: i32) -> (i32, i32) {
    %c0_i32 = arith.constant 0 : i32
    %c0_i32_0 = arith.constant 0 : i32
    %c0_i32_1 = arith.constant 0 : i32
    return %c0_i32, %c0_i32_0 : i32, i32
  }
  func.func @transform_5(%arg0: i32) -> (i32, i32) {
    %c0_i32 = arith.constant 0 : i32
    %c0_i32_0 = arith.constant 0 : i32
    %c0_i32_1 = arith.constant 0 : i32
    return %c0_i32, %c0_i32_0 : i32, i32
  }
  func.func @transform_6(%arg0: i32) -> (i32, i32) {
    %c0_i32 = arith.constant 0 : i32
    %c0_i32_0 = arith.constant 0 : i32
    %c0_i32_1 = arith.constant 0 : i32
    return %c0_i32, %c0_i32_0 : i32, i32
  }
  func.func @transform_7(%arg0: i32) -> (i32, i32) {
    %c0_i32 = arith.constant 0 : i32
    %c0_i32_0 = arith.constant 0 : i32
    return %arg0, %c0_i32 : i32, i32
  }
}

</mosaic_0001>

<llo_original>
// kernel: tpu_custom_call.1
$region0: #{tpu_custom_call.1}
  #allocation0 [shape = 'u32[]', space=smem, size = 0x4, offset = 0x4, fixed_abs, tag = 'smem constant byte address 0x4 - core index']
  #allocation1 [shape = 'u32[72,128]{1,0:T(1,128)}', space=vmem, size = 0x9000, scoped, tag = 'internal scratch']
  #allocation2 [shape = 'f32[1,1]{1,0:T(1,128)S(1)}', space=vmem, size = 0x200, scoped, tag = 'scoped memory for tpu_custom_call.1']
  %s0 = inlined_call_operand.hbm [shape: bf16[8,352], index: 0, kind: input, shape index: {}]
  %s1 = inlined_call_operand.hbm [shape: bf16[352,704], index: 1, kind: input, shape index: {}]
  %s2 = inlined_call_operand.hbm [shape: f32[1,704], index: 2, kind: input, shape index: {}]
  %s3 = inlined_call_operand.hbm [shape: bf16[704,352], index: 3, kind: input, shape index: {}]
  %s4 = inlined_call_operand.vmem [shape: f32[1,352], index: 4, kind: input, shape index: {}]
  %s5 = inlined_call_operand.vmem [shape: f32[1,352], index: 5, kind: input, shape index: {}]
  %s6 = inlined_call_operand.<no memory space> [shape: f32[1,1], index: 6, kind: input, shape index: {}]
  %s7 = inlined_call_operand.vmem [shape: f32[8,1], index: 7, kind: output, shape index: {}]
  %s8 = sld [smem:[#allocation0]]
  $region54: #{tpu_custom_call.1} parent=0
    _
  %s10 = ssub.s32 1, %s8
  %s11 = scalar_select 0, %s10, %s8
  %v12 = vstv %s6
  %13 = vst [vmem:[#allocation2] sm:$0x1] %v12
  $region1: #{tpu_custom_call.1} parent=0
    #allocation3 [shape = 'u8[6144]{0}', space=vmem, size = 0x1800, scoped, tag = 'input window, operand 0, single buffered']
    #allocation4 [shape = 's32[1]{0}', space=sflag, size = 0x4, scoped, tag = 'scoped memory for tpu_custom_call.1']
    #allocation5 [shape = 'u8[540672]{0}', space=vmem, size = 0x84000, scoped, tag = 'input window, operand 1, single buffered']
    #allocation6 [shape = 's32[1]{0}', space=sflag, size = 0x4, scoped, tag = 'scoped memory for tpu_custom_call.1']
    #allocation7 [shape = 'u8[3072]{0}', space=vmem, size = 0xc00, scoped, tag = 'input window, operand 2, single buffered']
    #allocation8 [shape = 'u8[540672]{0}', space=vmem, size = 0x84000, scoped, tag = 'input window, operand 3, single buffered']
    #allocation9 [shape = 's32[1]{0}', space=sflag, size = 0x4, scoped, tag = 'scoped memory for tpu_custom_call.1']
    %14 = vsyncpa [#allocation4], 0
    %15 = vsyncpa [#allocation6], 0
    %16 = vsyncpa [#allocation9], 0
    // Predicated region
    $region2: #{tpu_custom_call.1} parent=1 // pred_check
      _
    $region3: #{tpu_custom_call.1} parent=1 // pred_check_branch
      %18 = sbr.rel (0) target = $region5
    $region4: #{tpu_custom_call.1} parent=1 // pred_region
      %20 = vsyncadd [#allocation4], 0
      %s22 = sshll.u32 %s0, 4
      %s23 = int_to_ptr.hbm [resolvable:$true] %s22
      %s24 = sshll.u32 [#allocation3], 4
      %s25 = int_to_ptr.vmem [resolvable:$true] %s24
      %27 = dma.hbm_to_vmem [thread:$0]  %s23, 192, %s25, [#allocation4]
    $region5: #{tpu_custom_call.1} parent=1 // pred_fallthru
      _
    // Predicated region
    $region6: #{tpu_custom_call.1} parent=1 // pred_check
      _
    $region7: #{tpu_custom_call.1} parent=1 // pred_check_branch
      %29 = sbr.rel (0) target = $region9
    $region8: #{tpu_custom_call.1} parent=1 // pred_region
      %31 = vsyncadd [#allocation6], 0
      %s32 = sshll.u32 %s1, 4
      %s33 = int_to_ptr.hbm [resolvable:$true] %s32
      %s34 = sshll.u32 [#allocation5], 4
      %s35 = int_to_ptr.vmem [resolvable:$true] %s34
      %40 = dma.hbm_to_vmem [thread:$0]  %s33, 16896, %s35, [#allocation6], 384, 384, 24
    $region9: #{tpu_custom_call.1} parent=1 // pred_fallthru
      _
    // Predicated region
    $region10: #{tpu_custom_call.1} parent=1 // pred_check
      _
    $region11: #{tpu_custom_call.1} parent=1 // pred_check_branch
      %42 = sbr.rel (0) target = $region13
    $region12: #{tpu_custom_call.1} parent=1 // pred_region
      %44 = vsyncadd [#allocation6], 0
      %s46 = sshll.u32 %s2, 4
      %s47 = int_to_ptr.hbm [resolvable:$true] %s46
      %s48 = sshll.u32 [#allocation7], 4
      %s49 = int_to_ptr.vmem [resolvable:$true] %s48
      %51 = dma.hbm_to_vmem [thread:$0]  %s47, 96, %s49, [#allocation6]
    $region13: #{tpu_custom_call.1} parent=1 // pred_fallthru
      _
    // Predicated region
    $region14: #{tpu_custom_call.1} parent=1 // pred_check
      _
    $region15: #{tpu_custom_call.1} parent=1 // pred_check_branch
      %53 = sbr.rel (0) target = $region17
    $region16: #{tpu_custom_call.1} parent=1 // pred_region
      %55 = vsyncadd [#allocation9], 0
      %s56 = sshll.u32 %s3, 4
      %s57 = int_to_ptr.hbm [resolvable:$true] %s56
      %s58 = sshll.u32 [#allocation8], 4
      %s59 = int_to_ptr.vmem [resolvable:$true] %s58
      %64 = dma.hbm_to_vmem [thread:$0]  %s57, 16896, %s59, [#allocation9], 192, 192, 12
    $region17: #{tpu_custom_call.1} parent=1 // pred_fallthru
      _
    // Predicated region
    $region18: #{tpu_custom_call.1} parent=1 // pred_check
      _
    $region19: #{tpu_custom_call.1} parent=1 // pred_check_branch
      %66 = sbr.rel (0) target = $region21
    $region20: #{tpu_custom_call.1} parent=1 // pred_region
      _
    $region21: #{tpu_custom_call.1} parent=1 // pred_fallthru
      _
    // Predicated region
    $region22: #{tpu_custom_call.1} parent=1 // pred_check
      _
    $region23: #{tpu_custom_call.1} parent=1 // pred_check_branch
      %68 = sbr.rel (0) target = $region25
    $region24: #{tpu_custom_call.1} parent=1 // pred_region
      _
    $region25: #{tpu_custom_call.1} parent=1 // pred_fallthru
      _
    // Predicated region
    $region26: #{tpu_custom_call.1} parent=1 // pred_check
      _
    $region27: #{tpu_custom_call.1} parent=1 // pred_check_branch
      %70 = sbr.rel (0) target = $region29
    $region28: #{tpu_custom_call.1} parent=1 // pred_region
      _
    $region29: #{tpu_custom_call.1} parent=1 // pred_fallthru
      _
    // Predicated region
    $region30: #{tpu_custom_call.1} parent=1 // pred_check
      _
    $region31: #{tpu_custom_call.1} parent=1 // pred_check_branch
      %72 = sbr.rel (0) target = $region33
    $region32: #{tpu_custom_call.1} parent=1 // pred_region
      %74 = dma.done [#allocation4], 192
    $region33: #{tpu_custom_call.1} parent=1 // pred_fallthru
      _
    // Predicated region
    $region34: #{tpu_custom_call.1} parent=1 // pred_check
      _
    $region35: #{tpu_custom_call.1} parent=1 // pred_check_branch
      %76 = sbr.rel (0) target = $region37
    $region36: #{tpu_custom_call.1} parent=1 // pred_region
      %78 = dma.done [#allocation6], 16896
    $region37: #{tpu_custom_call.1} parent=1 // pred_fallthru
      _
    // Predicated region
    $region38: #{tpu_custom_call.1} parent=1 // pred_check
      _
    $region39: #{tpu_custom_call.1} parent=1 // pred_check_branch
      %80 = sbr.rel (0) target = $region41
    $region40: #{tpu_custom_call.1} parent=1 // pred_region
      %82 = dma.done [#allocation6], 96
    $region41: #{tpu_custom_call.1} parent=1 // pred_fallthru
      _
    // Predicated region
    $region42: #{tpu_custom_call.1} parent=1 // pred_check
      _
    $region43: #{tpu_custom_call.1} parent=1 // pred_check_branch
      %84 = sbr.rel (0) target = $region45
    $region44: #{tpu_custom_call.1} parent=1 // pred_region
      %86 = dma.done [#allocation9], 16896
    $region45: #{tpu_custom_call.1} parent=1 // pred_fallthru
      _
    %v88 = vld [vmem:[#allocation3] sm:$0xff]
    %v89 = vld [vmem:[#allocation3 + $0x8] sm:$0xf]
    %v90 = vld [vmem:[#allocation5] sm:$0xff]
    %v91 = vld [vmem:[#allocation5 + $0x8] sm:$0xff]
    %v92 = vld [vmem:[#allocation5 + $0x10] sm:$0xff]
    %v93 = vld [vmem:[#allocation5 + $0x18] sm:$0xff]
    %v94 = vld [vmem:[#allocation5 + $0x20] sm:$0xff]
    %v95 = vld [vmem:[#allocation5 + $0x28] sm:$0xff]
    %v96 = vld [vmem:[#allocation5 + $0x30] sm:$0xff]
    %v97 = vld [vmem:[#allocation5 + $0x38] sm:$0xff]
    %v98 = vld [vmem:[#allocation5 + $0x40] sm:$0xff]
    %v99 = vld [vmem:[#allocation5 + $0x48] sm:$0xff]
    %v100 = vld [vmem:[#allocation5 + $0x50] sm:$0xff]
    %v101 = vld [vmem:[#allocation5 + $0x58] sm:$0xff]
    %v102 = vld [vmem:[#allocation5 + $0x60] sm:$0xff]
    %v103 = vld [vmem:[#allocation5 + $0x68] sm:$0xff]
    %v104 = vld [vmem:[#allocation5 + $0x70] sm:$0xff]
    %v105 = vld [vmem:[#allocation5 + $0x78] sm:$0xff]
    %v106 = vld [vmem:[#allocation5 + $0x80] sm:$0xff]
    %v107 = vld [vmem:[#allocation5 + $0x88] sm:$0xff]
    %v108 = vld [vmem:[#allocation5 + $0x90] sm:$0xff]
    %v109 = vld [vmem:[#allocation5 + $0x98] sm:$0xff]
    %v110 = vld [vmem:[#allocation5 + $0xa0] sm:$0xff]
    %v111 = vld [vmem:[#allocation5 + $0xa8] sm:$0xff]
    %v112 = vld [vmem:[#allocation5 + $0xb0] sm:$0xff]
    %v113 = vld [vmem:[#allocation5 + $0xb8] sm:$0xff]
    %v114 = vld [vmem:[#allocation5 + $0xc0] sm:$0xff]
    %v115 = vld [vmem:[#allocation5 + $0xc8] sm:$0xff]
    %v116 = vld [vmem:[#allocation5 + $0xd0] sm:$0xff]
    %v117 = vld [vmem:[#allocation5 + $0xd8] sm:$0xff]
    %v118 = vld [vmem:[#allocation5 + $0xe0] sm:$0xff]
    %v119 = vld [vmem:[#allocation5 + $0xe8] sm:$0xff]
    %v120 = vld [vmem:[#allocation5 + $0xf0] sm:$0xff]
    %v121 = vld [vmem:[#allocation5 + $0xf8] sm:$0xff]
    %v122 = vld [vmem:[#allocation5 + $0x100] sm:$0xff]
    %v123 = vld [vmem:[#allocation5 + $0x108] sm:$0xff]
    %v124 = vld [vmem:[#allocation5 + $0x110] sm:$0xff]
    %v125 = vld [vmem:[#allocation5 + $0x118] sm:$0xff]
    %v126 = vld [vmem:[#allocation5 + $0x120] sm:$0xff]
    %v127 = vld [vmem:[#allocation5 + $0x128] sm:$0xff]
    %v128 = vld [vmem:[#allocation5 + $0x130] sm:$0xff]
    %v129 = vld [vmem:[#allocation5 + $0x138] sm:$0xff]
    %v130 = vld [vmem:[#allocation5 + $0x140] sm:$0xff]
    %v131 = vld [vmem:[#allocation5 + $0x148] sm:$0xff]
    %v132 = vld [vmem:[#allocation5 + $0x150] sm:$0xff]
    %v133 = vld [vmem:[#allocation5 + $0x158] sm:$0xff]
    %v134 = vld [vmem:[#allocation5 + $0x160] sm:$0xff]
    %v135 = vld [vmem:[#allocation5 + $0x168] sm:$0xff]
    %v136 = vld [vmem:[#allocation5 + $0x170] sm:$0xff]
    %v137 = vld [vmem:[#allocation5 + $0x178] sm:$0xff]
    %v138 = vld [vmem:[#allocation5 + $0x180] sm:$0xff]
    %v139 = vld [vmem:[#allocation5 + $0x188] sm:$0xff]
    %v140 = vld [vmem:[#allocation5 + $0x190] sm:$0xff]
    %v141 = vld [vmem:[#allocation5 + $0x198] sm:$0xff]
    %v142 = vld [vmem:[#allocation5 + $0x1a0] sm:$0xff]
    %v143 = vld [vmem:[#allocation5 + $0x1a8] sm:$0xff]
    %v144 = vld [vmem:[#allocation5 + $0x1b0] sm:$0xff]
    %v145 = vld [vmem:[#allocation5 + $0x1b8] sm:$0xff]
    %v146 = vld [vmem:[#allocation5 + $0x1c0] sm:$0xff]
    %v147 = vld [vmem:[#allocation5 + $0x1c8] sm:$0xff]
    %v148 = vld [vmem:[#allocation5 + $0x1d0] sm:$0xff]
    %v149 = vld [vmem:[#allocation5 + $0x1d8] sm:$0xff]
    %v150 = vld [vmem:[#allocation5 + $0x1e0] sm:$0xff]
    %v151 = vld [vmem:[#allocation5 + $0x1e8] sm:$0xff]
    %v152 = vld [vmem:[#allocation5 + $0x1f0] sm:$0xff]
    %v153 = vld [vmem:[#allocation5 + $0x1f8] sm:$0xff]
    %v154 = vld [vmem:[#allocation5 + $0x200] sm:$0xff]
    %v155 = vld [vmem:[#allocation5 + $0x208] sm:$0xff]
    %v156 = vld [vmem:[#allocation5 + $0x210] sm:$0xff]
    %v157 = vld [vmem:[#allocation5 + $0x218] sm:$0xff]
    %v158 = vld [vmem:[#allocation5 + $0x220] sm:$0xff]
    %v159 = vld [vmem:[#allocation5 + $0x228] sm:$0xff]
    %v160 = vld [vmem:[#allocation5 + $0x230] sm:$0xff]
    %v161 = vld [vmem:[#allocation5 + $0x238] sm:$0xff]
    %v162 = vld [vmem:[#allocation5 + $0x240] sm:$0xff]
    %v163 = vld [vmem:[#allocation5 + $0x248] sm:$0xff]
    %v164 = vld [vmem:[#allocation5 + $0x250] sm:$0xff]
    %v165 = vld [vmem:[#allocation5 + $0x258] sm:$0xff]
    %v166 = vld [vmem:[#allocation5 + $0x260] sm:$0xff]
    %v167 = vld [vmem:[#allocation5 + $0x268] sm:$0xff]
    %v168 = vld [vmem:[#allocation5 + $0x270] sm:$0xff]
    %v169 = vld [vmem:[#allocation5 + $0x278] sm:$0xff]
    %v170 = vld [vmem:[#allocation5 + $0x280] sm:$0xff]
    %v171 = vld [vmem:[#allocation5 + $0x288] sm:$0xff]
    %v172 = vld [vmem:[#allocation5 + $0x290] sm:$0xff]
    %v173 = vld [vmem:[#allocation5 + $0x298] sm:$0xff]
    %v174 = vld [vmem:[#allocation5 + $0x2a0] sm:$0xff]
    %v175 = vld [vmem:[#allocation5 + $0x2a8] sm:$0xff]
    %v176 = vld [vmem:[#allocation5 + $0x2b0] sm:$0xff]
    %v177 = vld [vmem:[#allocation5 + $0x2b8] sm:$0xff]
    %v178 = vld [vmem:[#allocation5 + $0x2c0] sm:$0xff]
    %v179 = vld [vmem:[#allocation5 + $0x2c8] sm:$0xff]
    %v180 = vld [vmem:[#allocation5 + $0x2d0] sm:$0xff]
    %v181 = vld [vmem:[#allocation5 + $0x2d8] sm:$0xff]
    %v182 = vld [vmem:[#allocation5 + $0x2e0] sm:$0xff]
    %v183 = vld [vmem:[#allocation5 + $0x2e8] sm:$0xff]
    %v184 = vld [vmem:[#allocation5 + $0x2f0] sm:$0xff]
    %v185 = vld [vmem:[#allocation5 + $0x2f8] sm:$0xff]
    %v186 = vld [vmem:[#allocation5 + $0x300] sm:$0xff]
    %v187 = vld [vmem:[#allocation5 + $0x308] sm:$0xff]
    %v188 = vld [vmem:[#allocation5 + $0x310] sm:$0xff]
    %v189 = vld [vmem:[#allocation5 + $0x318] sm:$0xff]
    %v190 = vld [vmem:[#allocation5 + $0x320] sm:$0xff]
    %v191 = vld [vmem:[#allocation5 + $0x328] sm:$0xff]
    %v192 = vld [vmem:[#allocation5 + $0x330] sm:$0xff]
    %v193 = vld [vmem:[#allocation5 + $0x338] sm:$0xff]
    %v194 = vld [vmem:[#allocation5 + $0x340] sm:$0xff]
    %v195 = vld [vmem:[#allocation5 + $0x348] sm:$0xff]
    %v196 = vld [vmem:[#allocation5 + $0x350] sm:$0xff]
    %v197 = vld [vmem:[#allocation5 + $0x358] sm:$0xff]
    %v198 = vld [vmem:[#allocation5 + $0x360] sm:$0xff]
    %v199 = vld [vmem:[#allocation5 + $0x368] sm:$0xff]
    %v200 = vld [vmem:[#allocation5 + $0x370] sm:$0xff]
    %v201 = vld [vmem:[#allocation5 + $0x378] sm:$0xff]
    %v202 = vld [vmem:[#allocation5 + $0x380] sm:$0xff]
    %v203 = vld [vmem:[#allocation5 + $0x388] sm:$0xff]
    %v204 = vld [vmem:[#allocation5 + $0x390] sm:$0xff]
    %v205 = vld [vmem:[#allocation5 + $0x398] sm:$0xff]
    %v206 = vld [vmem:[#allocation5 + $0x3a0] sm:$0xff]
    %v207 = vld [vmem:[#allocation5 + $0x3a8] sm:$0xff]
    %v208 = vld [vmem:[#allocation5 + $0x3b0] sm:$0xff]
    %v209 = vld [vmem:[#allocation5 + $0x3b8] sm:$0xff]
    %v210 = vld [vmem:[#allocation5 + $0x3c0] sm:$0xff]
    %v211 = vld [vmem:[#allocation5 + $0x3c8] sm:$0xff]
    %v212 = vld [vmem:[#allocation5 + $0x3d0] sm:$0xff]
    %v213 = vld [vmem:[#allocation5 + $0x3d8] sm:$0xff]
    %v214 = vld [vmem:[#allocation5 + $0x3e0] sm:$0xff]
    %v215 = vld [vmem:[#allocation5 + $0x3e8] sm:$0xff]
    %v216 = vld [vmem:[#allocation5 + $0x3f0] sm:$0xff]
    %v217 = vld [vmem:[#allocation5 + $0x3f8] sm:$0xff]
    %v218 = vld [vmem:[#allocation5 + $0x400] sm:$0xff]
    %v219 = vld [vmem:[#allocation5 + $0x408] sm:$0xff]
    %v220 = vld [vmem:[#allocation5 + $0x410] sm:$0xff]
    %v221 = vld [vmem:[#allocation5 + $0x418] sm:$0xff]
    %v222 = vld [vmem:[#allocation7] sm:$0x3f]
    %v224 = vperm.slane %v222, 0
    %v225 = vperm.slane %v222, 1
    %v226 = vperm.slane %v222, 2
    %v227 = vperm.slane %v222, 3
    %v228 = vperm.slane %v222, 4
    %v229 = vperm.slane %v222, 5
    %v238 = vunpack.c.l.b16 %v88
    %v239 = vunpack.c.h.b16 %v88
    %v240 = vunpack.c.l.b16 %v89
    %v241 = vpack.c.b16 %v238, %v238
    %v242 = vpack.c.b16 %v239, %v239
    %v243 = vpack.c.b16 %v240, %v240
    %v378 = vunpack.c.l.b16 %v90
    %v379 = vunpack.c.h.b16 %v90
    %v380 = vunpack.c.l.b16 %v91
    %v381 = vunpack.c.h.b16 %v91
    %v382 = vunpack.c.l.b16 %v92
    %v383 = vunpack.c.h.b16 %v92
    %v384 = vunpack.c.l.b16 %v93
    %v385 = vunpack.c.h.b16 %v93
    %v386 = vunpack.c.l.b16 %v94
    %v387 = vunpack.c.h.b16 %v94
    %v388 = vunpack.c.l.b16 %v95
    %v389 = vunpack.c.h.b16 %v95
    %v390 = vunpack.c.l.b16 %v96
    %v391 = vunpack.c.h.b16 %v96
    %v392 = vunpack.c.l.b16 %v97
    %v393 = vunpack.c.h.b16 %v97
    %v394 = vunpack.c.l.b16 %v98
    %v395 = vunpack.c.h.b16 %v98
    %v396 = vunpack.c.l.b16 %v99
    %v397 = vunpack.c.h.b16 %v99
    %v398 = vunpack.c.l.b16 %v100
    %v399 = vunpack.c.h.b16 %v100
    %v400 = vunpack.c.l.b16 %v101
    %v401 = vunpack.c.h.b16 %v101
    %v402 = vunpack.c.l.b16 %v102
    %v403 = vunpack.c.h.b16 %v102
    %v404 = vunpack.c.l.b16 %v103
    %v405 = vunpack.c.h.b16 %v103
    %v406 = vunpack.c.l.b16 %v104
    %v407 = vunpack.c.h.b16 %v104
    %v408 = vunpack.c.l.b16 %v105
    %v409 = vunpack.c.h.b16 %v105
    %v410 = vunpack.c.l.b16 %v106
    %v411 = vunpack.c.h.b16 %v106
    %v412 = vunpack.c.l.b16 %v107
    %v413 = vunpack.c.h.b16 %v107
    %v414 = vunpack.c.l.b16 %v108
    %v415 = vunpack.c.h.b16 %v108
    %v416 = vunpack.c.l.b16 %v109
    %v417 = vunpack.c.h.b16 %v109
    %v418 = vunpack.c.l.b16 %v110
    %v419 = vunpack.c.h.b16 %v110
    %v420 = vunpack.c.l.b16 %v111
    %v421 = vunpack.c.h.b16 %v111
    %v422 = vunpack.c.l.b16 %v112
    %v423 = vunpack.c.h.b16 %v112
    %v424 = vunpack.c.l.b16 %v113
    %v425 = vunpack.c.h.b16 %v113
    %v426 = vunpack.c.l.b16 %v114
    %v427 = vunpack.c.h.b16 %v114
    %v428 = vunpack.c.l.b16 %v115
    %v429 = vunpack.c.h.b16 %v115
    %v430 = vunpack.c.l.b16 %v116
    %v431 = vunpack.c.h.b16 %v116
    %v432 = vunpack.c.l.b16 %v117
    %v433 = vunpack.c.h.b16 %v117
    %v434 = vunpack.c.l.b16 %v118
    %v435 = vunpack.c.h.b16 %v118
    %v436 = vunpack.c.l.b16 %v119
    %v437 = vunpack.c.h.b16 %v119
    %v438 = vunpack.c.l.b16 %v120
    %v439 = vunpack.c.h.b16 %v120
    %v440 = vunpack.c.l.b16 %v121
    %v441 = vunpack.c.h.b16 %v121
    %v442 = vunpack.c.l.b16 %v122
    %v443 = vunpack.c.h.b16 %v122
    %v444 = vunpack.c.l.b16 %v123
    %v445 = vunpack.c.h.b16 %v123
    %v446 = vunpack.c.l.b16 %v124
    %v447 = vunpack.c.h.b16 %v124
    %v448 = vunpack.c.l.b16 %v125
    %v449 = vunpack.c.h.b16 %v125
    %v450 = vunpack.c.l.b16 %v126
    %v451 = vunpack.c.h.b16 %v126
    %v452 = vunpack.c.l.b16 %v127
    %v453 = vunpack.c.h.b16 %v127
    %v454 = vunpack.c.l.b16 %v128
    %v455 = vunpack.c.h.b16 %v128
    %v456 = vunpack.c.l.b16 %v129
    %v457 = vunpack.c.h.b16 %v129
    %v458 = vunpack.c.l.b16 %v130
    %v459 = vunpack.c.h.b16 %v130
    %v460 = vunpack.c.l.b16 %v131
    %v461 = vunpack.c.h.b16 %v131
    %v462 = vunpack.c.l.b16 %v132
    %v463 = vunpack.c.h.b16 %v132
    %v464 = vunpack.c.l.b16 %v133
    %v465 = vunpack.c.h.b16 %v133
    %v466 = vunpack.c.l.b16 %v134
    %v467 = vunpack.c.h.b16 %v134
    %v468 = vunpack.c.l.b16 %v135
    %v469 = vunpack.c.h.b16 %v135
    %v470 = vunpack.c.l.b16 %v136
    %v471 = vunpack.c.h.b16 %v136
    %v472 = vunpack.c.l.b16 %v137
    %v473 = vunpack.c.h.b16 %v137
    %v474 = vunpack.c.l.b16 %v138
    %v475 = vunpack.c.h.b16 %v138
    %v476 = vunpack.c.l.b16 %v139
    %v477 = vunpack.c.h.b16 %v139
    %v478 = vunpack.c.l.b16 %v140
    %v479 = vunpack.c.h.b16 %v140
    %v480 = vunpack.c.l.b16 %v141
    %v481 = vunpack.c.h.b16 %v141
    %v482 = vunpack.c.l.b16 %v142
    %v483 = vunpack.c.h.b16 %v142
    %v484 = vunpack.c.l.b16 %v143
    %v485 = vunpack.c.h.b16 %v143
    %v486 = vunpack.c.l.b16 %v144
    %v487 = vunpack.c.h.b16 %v144
    %v488 = vunpack.c.l.b16 %v145
    %v489 = vunpack.c.h.b16 %v145
    %v490 = vunpack.c.l.b16 %v146
    %v491 = vunpack.c.h.b16 %v146
    %v492 = vunpack.c.l.b16 %v147
    %v493 = vunpack.c.h.b16 %v147
    %v494 = vunpack.c.l.b16 %v148
    %v495 = vunpack.c.h.b16 %v148
    %v496 = vunpack.c.l.b16 %v149
    %v497 = vunpack.c.h.b16 %v149
    %v498 = vunpack.c.l.b16 %v150
    %v499 = vunpack.c.h.b16 %v150
    %v500 = vunpack.c.l.b16 %v151
    %v501 = vunpack.c.h.b16 %v151
    %v502 = vunpack.c.l.b16 %v152
    %v503 = vunpack.c.h.b16 %v152
    %v504 = vunpack.c.l.b16 %v153
    %v505 = vunpack.c.h.b16 %v153
    %v506 = vunpack.c.l.b16 %v154
    %v507 = vunpack.c.h.b16 %v154
    %v508 = vunpack.c.l.b16 %v155
    %v509 = vunpack.c.h.b16 %v155
    %v510 = vunpack.c.l.b16 %v156
    %v511 = vunpack.c.h.b16 %v156
    %v512 = vunpack.c.l.b16 %v157
    %v513 = vunpack.c.h.b16 %v157
    %v514 = vunpack.c.l.b16 %v158
    %v515 = vunpack.c.h.b16 %v158
    %v516 = vunpack.c.l.b16 %v159
    %v517 = vunpack.c.h.b16 %v159
    %v518 = vunpack.c.l.b16 %v160
    %v519 = vunpack.c.h.b16 %v160
    %v520 = vunpack.c.l.b16 %v161
    %v521 = vunpack.c.h.b16 %v161
    %v522 = vunpack.c.l.b16 %v162
    %v523 = vunpack.c.h.b16 %v162
    %v524 = vunpack.c.l.b16 %v163
    %v525 = vunpack.c.h.b16 %v163
    %v526 = vunpack.c.l.b16 %v164
    %v527 = vunpack.c.h.b16 %v164
    %v528 = vunpack.c.l.b16 %v165
    %v529 = vunpack.c.h.b16 %v165
    %v530 = vunpack.c.l.b16 %v166
    %v531 = vunpack.c.h.b16 %v166
    %v532 = vunpack.c.l.b16 %v167
    %v533 = vunpack.c.h.b16 %v167
    %v534 = vunpack.c.l.b16 %v168
    %v535 = vunpack.c.h.b16 %v168
    %v536 = vunpack.c.l.b16 %v169
    %v537 = vunpack.c.h.b16 %v169
    %v538 = vunpack.c.l.b16 %v170
    %v539 = vunpack.c.h.b16 %v170
    %v540 = vunpack.c.l.b16 %v171
    %v541 = vunpack.c.h.b16 %v171
    %v542 = vunpack.c.l.b16 %v172
    %v543 = vunpack.c.h.b16 %v172
    %v544 = vunpack.c.l.b16 %v173
    %v545 = vunpack.c.h.b16 %v173
    %v546 = vunpack.c.l.b16 %v174
    %v547 = vunpack.c.h.b16 %v174
    %v548 = vunpack.c.l.b16 %v175
    %v549 = vunpack.c.h.b16 %v175
    %v550 = vunpack.c.l.b16 %v176
    %v551 = vunpack.c.h.b16 %v176
    %v552 = vunpack.c.l.b16 %v177
    %v553 = vunpack.c.h.b16 %v177
    %v554 = vunpack.c.l.b16 %v178
    %v555 = vunpack.c.h.b16 %v178
    %v556 = vunpack.c.l.b16 %v179
    %v557 = vunpack.c.h.b16 %v179
    %v558 = vunpack.c.l.b16 %v180
    %v559 = vunpack.c.h.b16 %v180
    %v560 = vunpack.c.l.b16 %v181
    %v561 = vunpack.c.h.b16 %v181
    %v562 = vunpack.c.l.b16 %v182
    %v563 = vunpack.c.h.b16 %v182
    %v564 = vunpack.c.l.b16 %v183
    %v565 = vunpack.c.h.b16 %v183
    %v566 = vunpack.c.l.b16 %v184
    %v567 = vunpack.c.h.b16 %v184
    %v568 = vunpack.c.l.b16 %v185
    %v569 = vunpack.c.h.b16 %v185
    %v570 = vunpack.c.l.b16 %v186
    %v571 = vunpack.c.h.b16 %v186
    %v572 = vunpack.c.l.b16 %v187
    %v573 = vunpack.c.h.b16 %v187
    %v574 = vunpack.c.l.b16 %v188
    %v575 = vunpack.c.h.b16 %v188
    %v576 = vunpack.c.l.b16 %v189
    %v577 = vunpack.c.h.b16 %v189
    %v578 = vunpack.c.l.b16 %v190
    %v579 = vunpack.c.h.b16 %v190
    %v580 = vunpack.c.l.b16 %v191
    %v581 = vunpack.c.h.b16 %v191
    %v582 = vunpack.c.l.b16 %v192
    %v583 = vunpack.c.h.b16 %v192
    %v584 = vunpack.c.l.b16 %v193
    %v585 = vunpack.c.h.b16 %v193
    %v586 = vunpack.c.l.b16 %v194
    %v587 = vunpack.c.h.b16 %v194
    %v588 = vunpack.c.l.b16 %v195
    %v589 = vunpack.c.h.b16 %v195
    %v590 = vunpack.c.l.b16 %v196
    %v591 = vunpack.c.h.b16 %v196
    %v592 = vunpack.c.l.b16 %v197
    %v593 = vunpack.c.h.b16 %v197
    %v594 = vunpack.c.l.b16 %v198
    %v595 = vunpack.c.h.b16 %v198
    %v596 = vunpack.c.l.b16 %v199
    %v597 = vunpack.c.h.b16 %v199
    %v598 = vunpack.c.l.b16 %v200
    %v599 = vunpack.c.h.b16 %v200
    %v600 = vunpack.c.l.b16 %v201
    %v601 = vunpack.c.h.b16 %v201
    %v602 = vunpack.c.l.b16 %v202
    %v603 = vunpack.c.h.b16 %v202
    %v604 = vunpack.c.l.b16 %v203
    %v605 = vunpack.c.h.b16 %v203
    %v606 = vunpack.c.l.b16 %v204
    %v607 = vunpack.c.h.b16 %v204
    %v608 = vunpack.c.l.b16 %v205
    %v609 = vunpack.c.h.b16 %v205
    %v610 = vunpack.c.l.b16 %v206
    %v611 = vunpack.c.h.b16 %v206
    %v612 = vunpack.c.l.b16 %v207
    %v613 = vunpack.c.h.b16 %v207
    %v614 = vunpack.c.l.b16 %v208
    %v615 = vunpack.c.h.b16 %v208
    %v616 = vunpack.c.l.b16 %v209
    %v617 = vunpack.c.h.b16 %v209
    %v618 = vunpack.c.l.b16 %v210
    %v619 = vunpack.c.h.b16 %v210
    %v620 = vunpack.c.l.b16 %v211
    %v621 = vunpack.c.h.b16 %v211
    %v622 = vunpack.c.l.b16 %v212
    %v623 = vunpack.c.h.b16 %v212
    %v624 = vunpack.c.l.b16 %v213
    %v625 = vunpack.c.h.b16 %v213
    %v626 = vunpack.c.l.b16 %v214
    %v627 = vunpack.c.h.b16 %v214
    %v628 = vunpack.c.l.b16 %v215
    %v629 = vunpack.c.h.b16 %v215
    %v630 = vunpack.c.l.b16 %v216
    %v631 = vunpack.c.h.b16 %v216
    %v632 = vunpack.c.l.b16 %v217
    %v633 = vunpack.c.h.b16 %v217
    %v634 = vunpack.c.l.b16 %v218
    %v635 = vunpack.c.h.b16 %v218
    %v636 = vunpack.c.l.b16 %v219
    %v637 = vunpack.c.h.b16 %v219
    %v638 = vunpack.c.l.b16 %v220
    %v639 = vunpack.c.h.b16 %v220
    %v640 = vunpack.c.l.b16 %v221
    %v641 = vunpack.c.h.b16 %v221
    %v642 = vpack.c.b16 %v384, %v378
    %v643 = vpack.c.b16 %v385, %v379
    %v644 = vpack.c.b16 %v386, %v380
    %v645 = vpack.c.b16 %v387, %v381
    %v646 = vpack.c.b16 %v388, %v382
    %v647 = vpack.c.b16 %v389, %v383
    %v648 = vpack.c.b16 %v396, %v390
    %v649 = vpack.c.b16 %v397, %v391
    %v650 = vpack.c.b16 %v398, %v392
    %v651 = vpack.c.b16 %v399, %v393
    %v652 = vpack.c.b16 %v400, %v394
    %v653 = vpack.c.b16 %v401, %v395
    %v654 = vpack.c.b16 %v408, %v402
    %v655 = vpack.c.b16 %v409, %v403
    %v656 = vpack.c.b16 %v410, %v404
    %v657 = vpack.c.b16 %v411, %v405
    %v658 = vpack.c.b16 %v412, %v406
    %v659 = vpack.c.b16 %v413, %v407
    %v660 = vpack.c.b16 %v420, %v414
    %v661 = vpack.c.b16 %v421, %v415
    %v662 = vpack.c.b16 %v422, %v416
    %v663 = vpack.c.b16 %v423, %v417
    %v664 = vpack.c.b16 %v424, %v418
    %v665 = vpack.c.b16 %v425, %v419
    %v666 = vpack.c.b16 %v432, %v426
    %v667 = vpack.c.b16 %v433, %v427
    %v668 = vpack.c.b16 %v434, %v428
    %v669 = vpack.c.b16 %v435, %v429
    %v670 = vpack.c.b16 %v436, %v430
    %v671 = vpack.c.b16 %v437, %v431
    %v672 = vpack.c.b16 %v444, %v438
    %v673 = vpack.c.b16 %v445, %v439
    %v674 = vpack.c.b16 %v446, %v440
    %v675 = vpack.c.b16 %v447, %v441
    %v676 = vpack.c.b16 %v448, %v442
    %v677 = vpack.c.b16 %v449, %v443
    %v678 = vpack.c.b16 %v456, %v450
    %v679 = vpack.c.b16 %v457, %v451
    %v680 = vpack.c.b16 %v458, %v452
    %v681 = vpack.c.b16 %v459, %v453
    %v682 = vpack.c.b16 %v460, %v454
    %v683 = vpack.c.b16 %v461, %v455
    %v684 = vpack.c.b16 %v468, %v462
    %v685 = vpack.c.b16 %v469, %v463
    %v686 = vpack.c.b16 %v470, %v464
    %v687 = vpack.c.b16 %v471, %v465
    %v688 = vpack.c.b16 %v472, %v466
    %v689 = vpack.c.b16 %v473, %v467
    %v690 = vpack.c.b16 %v480, %v474
    %v691 = vpack.c.b16 %v481, %v475
    %v692 = vpack.c.b16 %v482, %v476
    %v693 = vpack.c.b16 %v483, %v477
    %v694 = vpack.c.b16 %v484, %v478
    %v695 = vpack.c.b16 %v485, %v479
    %v696 = vpack.c.b16 %v492, %v486
    %v697 = vpack.c.b16 %v493, %v487
    %v698 = vpack.c.b16 %v494, %v488
    %v699 = vpack.c.b16 %v495, %v489
    %v700 = vpack.c.b16 %v496, %v490
    %v701 = vpack.c.b16 %v497, %v491
    %v702 = vpack.c.b16 %v504, %v498
    %v703 = vpack.c.b16 %v505, %v499
    %v704 = vpack.c.b16 %v506, %v500
    %v705 = vpack.c.b16 %v507, %v501
    %v706 = vpack.c.b16 %v508, %v502
    %v707 = vpack.c.b16 %v509, %v503
    %v708 = vpack.c.b16 %v516, %v510
    %v709 = vpack.c.b16 %v517, %v511
    %v710 = vpack.c.b16 %v518, %v512
    %v711 = vpack.c.b16 %v519, %v513
    %v712 = vpack.c.b16 %v520, %v514
    %v713 = vpack.c.b16 %v521, %v515
    %v714 = vpack.c.b16 %v528, %v522
    %v715 = vpack.c.b16 %v529, %v523
    %v716 = vpack.c.b16 %v530, %v524
    %v717 = vpack.c.b16 %v531, %v525
    %v718 = vpack.c.b16 %v532, %v526
    %v719 = vpack.c.b16 %v533, %v527
    %v720 = vpack.c.b16 %v540, %v534
    %v721 = vpack.c.b16 %v541, %v535
    %v722 = vpack.c.b16 %v542, %v536
    %v723 = vpack.c.b16 %v543, %v537
    %v724 = vpack.c.b16 %v544, %v538
    %v725 = vpack.c.b16 %v545, %v539
    %v726 = vpack.c.b16 %v552, %v546
    %v727 = vpack.c.b16 %v553, %v547
    %v728 = vpack.c.b16 %v554, %v548
    %v729 = vpack.c.b16 %v555, %v549
    %v730 = vpack.c.b16 %v556, %v550
    %v731 = vpack.c.b16 %v557, %v551
    %v732 = vpack.c.b16 %v564, %v558
    %v733 = vpack.c.b16 %v565, %v559
    %v734 = vpack.c.b16 %v566, %v560
    %v735 = vpack.c.b16 %v567, %v561
    %v736 = vpack.c.b16 %v568, %v562
    %v737 = vpack.c.b16 %v569, %v563
    %v738 = vpack.c.b16 %v576, %v570
    %v739 = vpack.c.b16 %v577, %v571
    %v740 = vpack.c.b16 %v578, %v572
    %v741 = vpack.c.b16 %v579, %v573
    %v742 = vpack.c.b16 %v580, %v574
    %v743 = vpack.c.b16 %v581, %v575
    %v744 = vpack.c.b16 %v588, %v582
    %v745 = vpack.c.b16 %v589, %v583
    %v746 = vpack.c.b16 %v590, %v584
    %v747 = vpack.c.b16 %v591, %v585
    %v748 = vpack.c.b16 %v592, %v586
    %v749 = vpack.c.b16 %v593, %v587
    %v750 = vpack.c.b16 %v600, %v594
    %v751 = vpack.c.b16 %v601, %v595
    %v752 = vpack.c.b16 %v602, %v596
    %v753 = vpack.c.b16 %v603, %v597
    %v754 = vpack.c.b16 %v604, %v598
    %v755 = vpack.c.b16 %v605, %v599
    %v756 = vpack.c.b16 %v612, %v606
    %v757 = vpack.c.b16 %v613, %v607
    %v758 = vpack.c.b16 %v614, %v608
    %v759 = vpack.c.b16 %v615, %v609
    %v760 = vpack.c.b16 %v616, %v610
    %v761 = vpack.c.b16 %v617, %v611
    %v762 = vpack.c.b16 %v624, %v618
    %v763 = vpack.c.b16 %v625, %v619
    %v764 = vpack.c.b16 %v626, %v620
    %v765 = vpack.c.b16 %v627, %v621
    %v766 = vpack.c.b16 %v628, %v622
    %v767 = vpack.c.b16 %v629, %v623
    %v768 = vpack.c.b16 %v636, %v630
    %v769 = vpack.c.b16 %v637, %v631
    %v770 = vpack.c.b16 %v638, %v632
    %v771 = vpack.c.b16 %v639, %v633
    %v772 = vpack.c.b16 %v640, %v634
    %v773 = vpack.c.b16 %v641, %v635
    %vm906 = vcmask 785408
    %v908 = vsel %vm906, %v243, 0
    %910 = vmatpush.bf16.msra.mxu0 %v684
    %911 = vmatpush.bf16.msra.mxu0 %v678
    %912 = vmatpush.bf16.msra.mxu0 %v672
    %913 = vmatpush.bf16.msra.mxu0 %v666
    %914 = vmatpush.bf16.msra.mxu0 %v660
    %915 = vmatpush.bf16.msra.mxu0 %v654
    %916 = vmatpush.bf16.msra.mxu0 %v648
    %917 = vmatpush.bf16.msra.mxu0 %v642
    %918 = vmatmul.bf16.gmra.mxu0 %v241
    %v919 = vpop.f32.mrf.mxu0
    %v920 = vadd.f32 %v224, %v919
    %v921 = vpop.f32.mrf.mxu0
    %922 = vdwg.mxu0
    %923 = vmatpush.bf16.msra.mxu0 %v732
    %924 = vmatpush.bf16.msra.mxu0 %v726
    %925 = vmatpush.bf16.msra.mxu0 %v720
    %926 = vmatpush.bf16.msra.mxu0 %v714
    %927 = vmatpush.bf16.msra.mxu0 %v708
    %928 = vmatpush.bf16.msra.mxu0 %v702
    %929 = vmatpush.bf16.msra.mxu0 %v696
    %930 = vmatpush.bf16.msra.mxu0 %v690
    %931 = vmatmul.bf16.gmra.mxu0 %v242
    %v932 = vpop.f32.mrf.mxu0
    %v933 = vadd.f32 %v920, %v932
    %v934 = vpop.f32.mrf.mxu0
    %935 = vdwg.mxu0
    %936 = vmatpush.bf16.msra.mxu0 0
    %937 = vmatpush.bf16.msra.mxu0 0
    %938 = vmatpush.bf16.msra.mxu0 %v768
    %939 = vmatpush.bf16.msra.mxu0 %v762
    %940 = vmatpush.bf16.msra.mxu0 %v756
    %941 = vmatpush.bf16.msra.mxu0 %v750
    %942 = vmatpush.bf16.msra.mxu0 %v744
    %943 = vmatpush.bf16.msra.mxu0 %v738
    %944 = vmatmul.bf16.gmra.mxu0 %v908
    %v945 = vpop.f32.mrf.mxu0
    %v946 = vadd.f32 %v933, %v945
    %v947 = vpop.f32.mrf.mxu0
    %948 = vdwg.mxu0
    %949 = vmatpush.bf16.msra.mxu0 %v685
    %950 = vmatpush.bf16.msra.mxu0 %v679
    %951 = vmatpush.bf16.msra.mxu0 %v673
    %952 = vmatpush.bf16.msra.mxu0 %v667
    %953 = vmatpush.bf16.msra.mxu0 %v661
    %954 = vmatpush.bf16.msra.mxu0 %v655
    %955 = vmatpush.bf16.msra.mxu0 %v649
    %956 = vmatpush.bf16.msra.mxu0 %v643
    %957 = vmatmul.bf16.gmra.mxu0 %v241
    %v958 = vpop.f32.mrf.mxu0
    %v959 = vadd.f32 %v225, %v958
    %v960 = vpop.f32.mrf.mxu0
    %961 = vdwg.mxu0
    %962 = vmatpush.bf16.msra.mxu0 %v733
    %963 = vmatpush.bf16.msra.mxu0 %v727
    %964 = vmatpush.bf16.msra.mxu0 %v721
    %965 = vmatpush.bf16.msra.mxu0 %v715
    %966 = vmatpush.bf16.msra.mxu0 %v709
    %967 = vmatpush.bf16.msra.mxu0 %v703
    %968 = vmatpush.bf16.msra.mxu0 %v697
    %969 = vmatpush.bf16.msra.mxu0 %v691
    %970 = vmatmul.bf16.gmra.mxu0 %v242
    %v971 = vpop.f32.mrf.mxu0
    %v972 = vadd.f32 %v959, %v971
    %v973 = vpop.f32.mrf.mxu0
    %974 = vdwg.mxu0
    %975 = vmatpush.bf16.msra.mxu0 0
    %976 = vmatpush.bf16.msra.mxu0 0
    %977 = vmatpush.bf16.msra.mxu0 %v769
    %978 = vmatpush.bf16.msra.mxu0 %v763
    %979 = vmatpush.bf16.msra.mxu0 %v757
    %980 = vmatpush.bf16.msra.mxu0 %v751
    %981 = vmatpush.bf16.msra.mxu0 %v745
    %982 = vmatpush.bf16.msra.mxu0 %v739
    %983 = vmatmul.bf16.gmra.mxu0 %v908
    %v984 = vpop.f32.mrf.mxu0
    %v985 = vadd.f32 %v972, %v984
    %v986 = vpop.f32.mrf.mxu0
    %987 = vdwg.mxu0
    %988 = vmatpush.bf16.msra.mxu0 %v686
    %989 = vmatpush.bf16.msra.mxu0 %v680
    %990 = vmatpush.bf16.msra.mxu0 %v674
    %991 = vmatpush.bf16.msra.mxu0 %v668
    %992 = vmatpush.bf16.msra.mxu0 %v662
    %993 = vmatpush.bf16.msra.mxu0 %v656
    %994 = vmatpush.bf16.msra.mxu0 %v650
    %995 = vmatpush.bf16.msra.mxu0 %v644
    %996 = vmatmul.bf16.gmra.mxu0 %v241
    %v997 = vpop.f32.mrf.mxu0
    %v998 = vadd.f32 %v226, %v997
    %v999 = vpop.f32.mrf.mxu0
    %1000 = vdwg.mxu0
    %1001 = vmatpush.bf16.msra.mxu0 %v734
    %1002 = vmatpush.bf16.msra.mxu0 %v728
    %1003 = vmatpush.bf16.msra.mxu0 %v722
    %1004 = vmatpush.bf16.msra.mxu0 %v716
    %1005 = vmatpush.bf16.msra.mxu0 %v710
    %1006 = vmatpush.bf16.msra.mxu0 %v704
    %1007 = vmatpush.bf16.msra.mxu0 %v698
    %1008 = vmatpush.bf16.msra.mxu0 %v692
    %1009 = vmatmul.bf16.gmra.mxu0 %v242
    %v1010 = vpop.f32.mrf.mxu0
    %v1011 = vadd.f32 %v998, %v1010
    %v1012 = vpop.f32.mrf.mxu0
    %1013 = vdwg.mxu0
    %1014 = vmatpush.bf16.msra.mxu0 0
    %1015 = vmatpush.bf16.msra.mxu0 0
    %1016 = vmatpush.bf16.msra.mxu0 %v770
    %1017 = vmatpush.bf16.msra.mxu0 %v764
    %1018 = vmatpush.bf16.msra.mxu0 %v758
    %1019 = vmatpush.bf16.msra.mxu0 %v752
    %1020 = vmatpush.bf16.msra.mxu0 %v746
    %1021 = vmatpush.bf16.msra.mxu0 %v740
    %1022 = vmatmul.bf16.gmra.mxu0 %v908
    %v1023 = vpop.f32.mrf.mxu0
    %v1024 = vadd.f32 %v1011, %v1023
    %v1025 = vpop.f32.mrf.mxu0
    %1026 = vdwg.mxu0
    %1027 = vmatpush.bf16.msra.mxu0 %v687
    %1028 = vmatpush.bf16.msra.mxu0 %v681
    %1029 = vmatpush.bf16.msra.mxu0 %v675
    %1030 = vmatpush.bf16.msra.mxu0 %v669
    %1031 = vmatpush.bf16.msra.mxu0 %v663
    %1032 = vmatpush.bf16.msra.mxu0 %v657
    %1033 = vmatpush.bf16.msra.mxu0 %v651
    %1034 = vmatpush.bf16.msra.mxu0 %v645
    %1035 = vmatmul.bf16.gmra.mxu0 %v241
    %v1036 = vpop.f32.mrf.mxu0
    %v1037 = vadd.f32 %v227, %v1036
    %v1038 = vpop.f32.mrf.mxu0
    %1039 = vdwg.mxu0
    %1040 = vmatpush.bf16.msra.mxu0 %v735
    %1041 = vmatpush.bf16.msra.mxu0 %v729
    %1042 = vmatpush.bf16.msra.mxu0 %v723
    %1043 = vmatpush.bf16.msra.mxu0 %v717
    %1044 = vmatpush.bf16.msra.mxu0 %v711
    %1045 = vmatpush.bf16.msra.mxu0 %v705
    %1046 = vmatpush.bf16.msra.mxu0 %v699
    %1047 = vmatpush.bf16.msra.mxu0 %v693
    %1048 = vmatmul.bf16.gmra.mxu0 %v242
    %v1049 = vpop.f32.mrf.mxu0
    %v1050 = vadd.f32 %v1037, %v1049
    %v1051 = vpop.f32.mrf.mxu0
    %1052 = vdwg.mxu0
    %1053 = vmatpush.bf16.msra.mxu0 0
    %1054 = vmatpush.bf16.msra.mxu0 0
    %1055 = vmatpush.bf16.msra.mxu0 %v771
    %1056 = vmatpush.bf16.msra.mxu0 %v765
    %1057 = vmatpush.bf16.msra.mxu0 %v759
    %1058 = vmatpush.bf16.msra.mxu0 %v753
    %1059 = vmatpush.bf16.msra.mxu0 %v747
    %1060 = vmatpush.bf16.msra.mxu0 %v741
    %1061 = vmatmul.bf16.gmra.mxu0 %v908
    %v1062 = vpop.f32.mrf.mxu0
    %v1063 = vadd.f32 %v1050, %v1062
    %v1064 = vpop.f32.mrf.mxu0
    %1065 = vdwg.mxu0
    %1066 = vmatpush.bf16.msra.mxu0 %v688
    %1067 = vmatpush.bf16.msra.mxu0 %v682
    %1068 = vmatpush.bf16.msra.mxu0 %v676
    %1069 = vmatpush.bf16.msra.mxu0 %v670
    %1070 = vmatpush.bf16.msra.mxu0 %v664
    %1071 = vmatpush.bf16.msra.mxu0 %v658
    %1072 = vmatpush.bf16.msra.mxu0 %v652
    %1073 = vmatpush.bf16.msra.mxu0 %v646
    %1074 = vmatmul.bf16.gmra.mxu0 %v241
    %v1075 = vpop.f32.mrf.mxu0
    %v1076 = vadd.f32 %v228, %v1075
    %v1077 = vpop.f32.mrf.mxu0
    %1078 = vdwg.mxu0
    %1079 = vmatpush.bf16.msra.mxu0 %v736
    %1080 = vmatpush.bf16.msra.mxu0 %v730
    %1081 = vmatpush.bf16.msra.mxu0 %v724
    %1082 = vmatpush.bf16.msra.mxu0 %v718
    %1083 = vmatpush.bf16.msra.mxu0 %v712
    %1084 = vmatpush.bf16.msra.mxu0 %v706
    %1085 = vmatpush.bf16.msra.mxu0 %v700
    %1086 = vmatpush.bf16.msra.mxu0 %v694
    %1087 = vmatmul.bf16.gmra.mxu0 %v242
    %v1088 = vpop.f32.mrf.mxu0
    %v1089 = vadd.f32 %v1076, %v1088
    %v1090 = vpop.f32.mrf.mxu0
    %1091 = vdwg.mxu0
    %1092 = vmatpush.bf16.msra.mxu0 0
    %1093 = vmatpush.bf16.msra.mxu0 0
    %1094 = vmatpush.bf16.msra.mxu0 %v772
    %1095 = vmatpush.bf16.msra.mxu0 %v766
    %1096 = vmatpush.bf16.msra.mxu0 %v760
    %1097 = vmatpush.bf16.msra.mxu0 %v754
    %1098 = vmatpush.bf16.msra.mxu0 %v748
    %1099 = vmatpush.bf16.msra.mxu0 %v742
    %1100 = vmatmul.bf16.gmra.mxu0 %v908
    %v1101 = vpop.f32.mrf.mxu0
    %v1102 = vadd.f32 %v1089, %v1101
    %v1103 = vpop.f32.mrf.mxu0
    %1104 = vdwg.mxu0
    %1105 = vmatpush.bf16.msra.mxu0 %v689
    %1106 = vmatpush.bf16.msra.mxu0 %v683
    %1107 = vmatpush.bf16.msra.mxu0 %v677
    %1108 = vmatpush.bf16.msra.mxu0 %v671
    %1109 = vmatpush.bf16.msra.mxu0 %v665
    %1110 = vmatpush.bf16.msra.mxu0 %v659
    %1111 = vmatpush.bf16.msra.mxu0 %v653
    %1112 = vmatpush.bf16.msra.mxu0 %v647
    %1113 = vmatmul.bf16.gmra.mxu0 %v241
    %v1114 = vpop.f32.mrf.mxu0
    %v1115 = vadd.f32 %v229, %v1114
    %v1116 = vpop.f32.mrf.mxu0
    %1117 = vdwg.mxu0
    %1118 = vmatpush.bf16.msra.mxu0 %v737
    %1119 = vmatpush.bf16.msra.mxu0 %v731
    %1120 = vmatpush.bf16.msra.mxu0 %v725
    %1121 = vmatpush.bf16.msra.mxu0 %v719
    %1122 = vmatpush.bf16.msra.mxu0 %v713
    %1123 = vmatpush.bf16.msra.mxu0 %v707
    %1124 = vmatpush.bf16.msra.mxu0 %v701
    %1125 = vmatpush.bf16.msra.mxu0 %v695
    %1126 = vmatmul.bf16.gmra.mxu0 %v242
    %v1127 = vpop.f32.mrf.mxu0
    %v1128 = vadd.f32 %v1115, %v1127
    %v1129 = vpop.f32.mrf.mxu0
    %1130 = vdwg.mxu0
    %1131 = vmatpush.bf16.msra.mxu0 0
    %1132 = vmatpush.bf16.msra.mxu0 0
    %1133 = vmatpush.bf16.msra.mxu0 %v773
    %1134 = vmatpush.bf16.msra.mxu0 %v767
    %1135 = vmatpush.bf16.msra.mxu0 %v761
    %1136 = vmatpush.bf16.msra.mxu0 %v755
    %1137 = vmatpush.bf16.msra.mxu0 %v749
    %1138 = vmatpush.bf16.msra.mxu0 %v743
    %1139 = vmatmul.bf16.gmra.mxu0 %v908
    %v1140 = vpop.f32.mrf.mxu0
    %v1141 = vadd.f32 %v1128, %v1140
    %v1142 = vpop.f32.mrf.mxu0
    %1143 = vdwg.mxu0
    %v1144 = vmax.f32 %v946, 0.0
    %v1145 = vmax.f32 %v985, 0.0
    %v1146 = vmax.f32 %v1024, 0.0
    %v1147 = vmax.f32 %v1063, 0.0
    %v1148 = vmax.f32 %v1102, 0.0
    %v1149 = vmax.f32 %v1141, 0.0
    %v1150 = vpack.c.bf16 %v1144, %v1144
    %v1151 = vpack.c.bf16 %v1145, %v1145
    %v1152 = vpack.c.bf16 %v1146, %v1146
    %v1153 = vpack.c.bf16 %v1147, %v1147
    %v1154 = vpack.c.bf16 %v1148, %v1148
    %v1155 = vpack.c.bf16 %v1149, %v1149
    %v1156 = vld [vmem:[#allocation8] sm:$0xff]
    %v1157 = vld [vmem:[#allocation8 + $0x8] sm:$0xf]
    %v1158 = vld [vmem:[#allocation8 + $0xc] sm:$0xff]
    %v1159 = vld [vmem:[#allocation8 + $0x14] sm:$0xf]
    %v1160 = vld [vmem:[#allocation8 + $0x18] sm:$0xff]
    %v1161 = vld [vmem:[#allocation8 + $0x20] sm:$0xf]
    %v1162 = vld [vmem:[#allocation8 + $0x24] sm:$0xff]
    %v1163 = vld [vmem:[#allocation8 + $0x2c] sm:$0xf]
    %v1164 = vld [vmem:[#allocation8 + $0x30] sm:$0xff]
    %v1165 = vld [vmem:[#allocation8 + $0x38] sm:$0xf]
    %v1166 = vld [vmem:[#allocation8 + $0x3c] sm:$0xff]
    %v1167 = vld [vmem:[#allocation8 + $0x44] sm:$0xf]
    %v1168 = vld [vmem:[#allocation8 + $0x48] sm:$0xff]
    %v1169 = vld [vmem:[#allocation8 + $0x50] sm:$0xf]
    %v1170 = vld [vmem:[#allocation8 + $0x54] sm:$0xff]
    %v1171 = vld [vmem:[#allocation8 + $0x5c] sm:$0xf]
    %v1172 = vld [vmem:[#allocation8 + $0x60] sm:$0xff]
    %v1173 = vld [vmem:[#allocation8 + $0x68] sm:$0xf]
    %v1174 = vld [vmem:[#allocation8 + $0x6c] sm:$0xff]
    %v1175 = vld [vmem:[#allocation8 + $0x74] sm:$0xf]
    %v1176 = vld [vmem:[#allocation8 + $0x78] sm:$0xff]
    %v1177 = vld [vmem:[#allocation8 + $0x80] sm:$0xf]
    %v1178 = vld [vmem:[#allocation8 + $0x84] sm:$0xff]
    %v1179 = vld [vmem:[#allocation8 + $0x8c] sm:$0xf]
    %v1180 = vld [vmem:[#allocation8 + $0x90] sm:$0xff]
    %v1181 = vld [vmem:[#allocation8 + $0x98] sm:$0xf]
    %v1182 = vld [vmem:[#allocation8 + $0x9c] sm:$0xff]
    %v1183 = vld [vmem:[#allocation8 + $0xa4] sm:$0xf]
    %v1184 = vld [vmem:[#allocation8 + $0xa8] sm:$0xff]
    %v1185 = vld [vmem:[#allocation8 + $0xb0] sm:$0xf]
    %v1186 = vld [vmem:[#allocation8 + $0xb4] sm:$0xff]
    %v1187 = vld [vmem:[#allocation8 + $0xbc] sm:$0xf]
    %v1188 = vld [vmem:[#allocation8 + $0xc0] sm:$0xff]
    %v1189 = vld [vmem:[#allocation8 + $0xc8] sm:$0xf]
    %v1190 = vld [vmem:[#allocation8 + $0xcc] sm:$0xff]
    %v1191 = vld [vmem:[#allocation8 + $0xd4] sm:$0xf]
    %v1192 = vld [vmem:[#allocation8 + $0xd8] sm:$0xff]
    %v1193 = vld [vmem:[#allocation8 + $0xe0] sm:$0xf]
    %v1194 = vld [vmem:[#allocation8 + $0xe4] sm:$0xff]
    %v1195 = vld [vmem:[#allocation8 + $0xec] sm:$0xf]
    %v1196 = vld [vmem:[#allocation8 + $0xf0] sm:$0xff]
    %v1197 = vld [vmem:[#allocation8 + $0xf8] sm:$0xf]
    %v1198 = vld [vmem:[#allocation8 + $0xfc] sm:$0xff]
    %v1199 = vld [vmem:[#allocation8 + $0x104] sm:$0xf]
    %v1200 = vld [vmem:[#allocation8 + $0x108] sm:$0xff]
    %v1201 = vld [vmem:[#allocation8 + $0x110] sm:$0xf]
    %v1202 = vld [vmem:[#allocation8 + $0x114] sm:$0xff]
    %v1203 = vld [vmem:[#allocation8 + $0x11c] sm:$0xf]
    %v1204 = vld [vmem:[#allocation8 + $0x120] sm:$0xff]
    %v1205 = vld [vmem:[#allocation8 + $0x128] sm:$0xf]
    %v1206 = vld [vmem:[#allocation8 + $0x12c] sm:$0xff]
    %v1207 = vld [vmem:[#allocation8 + $0x134] sm:$0xf]
    %v1208 = vld [vmem:[#allocation8 + $0x138] sm:$0xff]
    %v1209 = vld [vmem:[#allocation8 + $0x140] sm:$0xf]
    %v1210 = vld [vmem:[#allocation8 + $0x144] sm:$0xff]
    %v1211 = vld [vmem:[#allocation8 + $0x14c] sm:$0xf]
    %v1212 = vld [vmem:[#allocation8 + $0x150] sm:$0xff]
    %v1213 = vld [vmem:[#allocation8 + $0x158] sm:$0xf]
    %v1214 = vld [vmem:[#allocation8 + $0x15c] sm:$0xff]
    %v1215 = vld [vmem:[#allocation8 + $0x164] sm:$0xf]
    %v1216 = vld [vmem:[#allocation8 + $0x168] sm:$0xff]
    %v1217 = vld [vmem:[#allocation8 + $0x170] sm:$0xf]
    %v1218 = vld [vmem:[#allocation8 + $0x174] sm:$0xff]
    %v1219 = vld [vmem:[#allocation8 + $0x17c] sm:$0xf]
    %v1220 = vld [vmem:[#allocation8 + $0x180] sm:$0xff]
    %v1221 = vld [vmem:[#allocation8 + $0x188] sm:$0xf]
    %v1222 = vld [vmem:[#allocation8 + $0x18c] sm:$0xff]
    %v1223 = vld [vmem:[#allocation8 + $0x194] sm:$0xf]
    %v1224 = vld [vmem:[#allocation8 + $0x198] sm:$0xff]
    %v1225 = vld [vmem:[#allocation8 + $0x1a0] sm:$0xf]
    %v1226 = vld [vmem:[#allocation8 + $0x1a4] sm:$0xff]
    %v1227 = vld [vmem:[#allocation8 + $0x1ac] sm:$0xf]
    %v1228 = vld [vmem:[#allocation8 + $0x1b0] sm:$0xff]
    %v1229 = vld [vmem:[#allocation8 + $0x1b8] sm:$0xf]
    %v1230 = vld [vmem:[#allocation8 + $0x1bc] sm:$0xff]
    %v1231 = vld [vmem:[#allocation8 + $0x1c4] sm:$0xf]
    %v1232 = vld [vmem:[#allocation8 + $0x1c8] sm:$0xff]
    %v1233 = vld [vmem:[#allocation8 + $0x1d0] sm:$0xf]
    %v1234 = vld [vmem:[#allocation8 + $0x1d4] sm:$0xff]
    %v1235 = vld [vmem:[#allocation8 + $0x1dc] sm:$0xf]
    %v1236 = vld [vmem:[#allocation8 + $0x1e0] sm:$0xff]
    %v1237 = vld [vmem:[#allocation8 + $0x1e8] sm:$0xf]
    %v1238 = vld [vmem:[#allocation8 + $0x1ec] sm:$0xff]
    %v1239 = vld [vmem:[#allocation8 + $0x1f4] sm:$0xf]
    %v1240 = vld [vmem:[#allocation8 + $0x1f8] sm:$0xff]
    %v1241 = vld [vmem:[#allocation8 + $0x200] sm:$0xf]
    %v1242 = vld [vmem:[#allocation8 + $0x204] sm:$0xff]
    %v1243 = vld [vmem:[#allocation8 + $0x20c] sm:$0xf]
    %v1244 = vld [vmem:[#allocation8 + $0x210] sm:$0xff]
    %v1245 = vld [vmem:[#allocation8 + $0x218] sm:$0xf]
    %v1246 = vld [vmem:[#allocation8 + $0x21c] sm:$0xff]
    %v1247 = vld [vmem:[#allocation8 + $0x224] sm:$0xf]
    %v1248 = vld [vmem:[#allocation8 + $0x228] sm:$0xff]
    %v1249 = vld [vmem:[#allocation8 + $0x230] sm:$0xf]
    %v1250 = vld [vmem:[#allocation8 + $0x234] sm:$0xff]
    %v1251 = vld [vmem:[#allocation8 + $0x23c] sm:$0xf]
    %v1252 = vld [vmem:[#allocation8 + $0x240] sm:$0xff]
    %v1253 = vld [vmem:[#allocation8 + $0x248] sm:$0xf]
    %v1254 = vld [vmem:[#allocation8 + $0x24c] sm:$0xff]
    %v1255 = vld [vmem:[#allocation8 + $0x254] sm:$0xf]
    %v1256 = vld [vmem:[#allocation8 + $0x258] sm:$0xff]
    %v1257 = vld [vmem:[#allocation8 + $0x260] sm:$0xf]
    %v1258 = vld [vmem:[#allocation8 + $0x264] sm:$0xff]
    %v1259 = vld [vmem:[#allocation8 + $0x26c] sm:$0xf]
    %v1260 = vld [vmem:[#allocation8 + $0x270] sm:$0xff]
    %v1261 = vld [vmem:[#allocation8 + $0x278] sm:$0xf]
    %v1262 = vld [vmem:[#allocation8 + $0x27c] sm:$0xff]
    %v1263 = vld [vmem:[#allocation8 + $0x284] sm:$0xf]
    %v1264 = vld [vmem:[#allocation8 + $0x288] sm:$0xff]
    %v1265 = vld [vmem:[#allocation8 + $0x290] sm:$0xf]
    %v1266 = vld [vmem:[#allocation8 + $0x294] sm:$0xff]
    %v1267 = vld [vmem:[#allocation8 + $0x29c] sm:$0xf]
    %v1268 = vld [vmem:[#allocation8 + $0x2a0] sm:$0xff]
    %v1269 = vld [vmem:[#allocation8 + $0x2a8] sm:$0xf]
    %v1270 = vld [vmem:[#allocation8 + $0x2ac] sm:$0xff]
    %v1271 = vld [vmem:[#allocation8 + $0x2b4] sm:$0xf]
    %v1272 = vld [vmem:[#allocation8 + $0x2b8] sm:$0xff]
    %v1273 = vld [vmem:[#allocation8 + $0x2c0] sm:$0xf]
    %v1274 = vld [vmem:[#allocation8 + $0x2c4] sm:$0xff]
    %v1275 = vld [vmem:[#allocation8 + $0x2cc] sm:$0xf]
    %v1276 = vld [vmem:[#allocation8 + $0x2d0] sm:$0xff]
    %v1277 = vld [vmem:[#allocation8 + $0x2d8] sm:$0xf]
    %v1278 = vld [vmem:[#allocation8 + $0x2dc] sm:$0xff]
    %v1279 = vld [vmem:[#allocation8 + $0x2e4] sm:$0xf]
    %v1280 = vld [vmem:[#allocation8 + $0x2e8] sm:$0xff]
    %v1281 = vld [vmem:[#allocation8 + $0x2f0] sm:$0xf]
    %v1282 = vld [vmem:[#allocation8 + $0x2f4] sm:$0xff]
    %v1283 = vld [vmem:[#allocation8 + $0x2fc] sm:$0xf]
    %v1284 = vld [vmem:[#allocation8 + $0x300] sm:$0xff]
    %v1285 = vld [vmem:[#allocation8 + $0x308] sm:$0xf]
    %v1286 = vld [vmem:[#allocation8 + $0x30c] sm:$0xff]
    %v1287 = vld [vmem:[#allocation8 + $0x314] sm:$0xf]
    %v1288 = vld [vmem:[#allocation8 + $0x318] sm:$0xff]
    %v1289 = vld [vmem:[#allocation8 + $0x320] sm:$0xf]
    %v1290 = vld [vmem:[#allocation8 + $0x324] sm:$0xff]
    %v1291 = vld [vmem:[#allocation8 + $0x32c] sm:$0xf]
    %v1292 = vld [vmem:[#allocation8 + $0x330] sm:$0xff]
    %v1293 = vld [vmem:[#allocation8 + $0x338] sm:$0xf]
    %v1294 = vld [vmem:[#allocation8 + $0x33c] sm:$0xff]
    %v1295 = vld [vmem:[#allocation8 + $0x344] sm:$0xf]
    %v1296 = vld [vmem:[#allocation8 + $0x348] sm:$0xff]
    %v1297 = vld [vmem:[#allocation8 + $0x350] sm:$0xf]
    %v1298 = vld [vmem:[#allocation8 + $0x354] sm:$0xff]
    %v1299 = vld [vmem:[#allocation8 + $0x35c] sm:$0xf]
    %v1300 = vld [vmem:[#allocation8 + $0x360] sm:$0xff]
    %v1301 = vld [vmem:[#allocation8 + $0x368] sm:$0xf]
    %v1302 = vld [vmem:[#allocation8 + $0x36c] sm:$0xff]
    %v1303 = vld [vmem:[#allocation8 + $0x374] sm:$0xf]
    %v1304 = vld [vmem:[#allocation8 + $0x378] sm:$0xff]
    %v1305 = vld [vmem:[#allocation8 + $0x380] sm:$0xf]
    %v1306 = vld [vmem:[#allocation8 + $0x384] sm:$0xff]
    %v1307 = vld [vmem:[#allocation8 + $0x38c] sm:$0xf]
    %v1308 = vld [vmem:[#allocation8 + $0x390] sm:$0xff]
    %v1309 = vld [vmem:[#allocation8 + $0x398] sm:$0xf]
    %v1310 = vld [vmem:[#allocation8 + $0x39c] sm:$0xff]
    %v1311 = vld [vmem:[#allocation8 + $0x3a4] sm:$0xf]
    %v1312 = vld [vmem:[#allocation8 + $0x3a8] sm:$0xff]
    %v1313 = vld [vmem:[#allocation8 + $0x3b0] sm:$0xf]
    %v1314 = vld [vmem:[#allocation8 + $0x3b4] sm:$0xff]
    %v1315 = vld [vmem:[#allocation8 + $0x3bc] sm:$0xf]
    %v1316 = vld [vmem:[#allocation8 + $0x3c0] sm:$0xff]
    %v1317 = vld [vmem:[#allocation8 + $0x3c8] sm:$0xf]
    %v1318 = vld [vmem:[#allocation8 + $0x3cc] sm:$0xff]
    %v1319 = vld [vmem:[#allocation8 + $0x3d4] sm:$0xf]
    %v1320 = vld [vmem:[#allocation8 + $0x3d8] sm:$0xff]
    %v1321 = vld [vmem:[#allocation8 + $0x3e0] sm:$0xf]
    %v1322 = vld [vmem:[#allocation8 + $0x3e4] sm:$0xff]
    %v1323 = vld [vmem:[#allocation8 + $0x3ec] sm:$0xf]
    %v1324 = vld [vmem:[#allocation8 + $0x3f0] sm:$0xff]
    %v1325 = vld [vmem:[#allocation8 + $0x3f8] sm:$0xf]
    %v1326 = vld [vmem:[#allocation8 + $0x3fc] sm:$0xff]
    %v1327 = vld [vmem:[#allocation8 + $0x404] sm:$0xf]
    %v1328 = vld [vmem:[#allocation8 + $0x408] sm:$0xff]
    %v1329 = vld [vmem:[#allocation8 + $0x410] sm:$0xf]
    %v1330 = vld [vmem:[#allocation8 + $0x414] sm:$0xff]
    %v1331 = vld [vmem:[#allocation8 + $0x41c] sm:$0xf]
    %v1332 = vld [vmem:[%s4] sm:$0x7]
    %v1334 = vperm.slane %v1332, 0
    %v1335 = vperm.slane %v1332, 1
    %v1336 = vperm.slane %v1332, 2
    %v1516 = vunpack.c.l.b16 %v1156
    %v1517 = vunpack.c.h.b16 %v1156
    %v1518 = vunpack.c.l.b16 %v1157
    %v1519 = vunpack.c.l.b16 %v1158
    %v1520 = vunpack.c.h.b16 %v1158
    %v1521 = vunpack.c.l.b16 %v1159
    %v1522 = vunpack.c.l.b16 %v1160
    %v1523 = vunpack.c.h.b16 %v1160
    %v1524 = vunpack.c.l.b16 %v1161
    %v1525 = vunpack.c.l.b16 %v1162
    %v1526 = vunpack.c.h.b16 %v1162
    %v1527 = vunpack.c.l.b16 %v1163
    %v1528 = vunpack.c.l.b16 %v1164
    %v1529 = vunpack.c.h.b16 %v1164
    %v1530 = vunpack.c.l.b16 %v1165
    %v1531 = vunpack.c.l.b16 %v1166
    %v1532 = vunpack.c.h.b16 %v1166
    %v1533 = vunpack.c.l.b16 %v1167
    %v1534 = vunpack.c.l.b16 %v1168
    %v1535 = vunpack.c.h.b16 %v1168
    %v1536 = vunpack.c.l.b16 %v1169
    %v1537 = vunpack.c.l.b16 %v1170
    %v1538 = vunpack.c.h.b16 %v1170
    %v1539 = vunpack.c.l.b16 %v1171
    %v1540 = vunpack.c.l.b16 %v1172
    %v1541 = vunpack.c.h.b16 %v1172
    %v1542 = vunpack.c.l.b16 %v1173
    %v1543 = vunpack.c.l.b16 %v1174
    %v1544 = vunpack.c.h.b16 %v1174
    %v1545 = vunpack.c.l.b16 %v1175
    %v1546 = vunpack.c.l.b16 %v1176
    %v1547 = vunpack.c.h.b16 %v1176
    %v1548 = vunpack.c.l.b16 %v1177
    %v1549 = vunpack.c.l.b16 %v1178
    %v1550 = vunpack.c.h.b16 %v1178
    %v1551 = vunpack.c.l.b16 %v1179
    %v1552 = vunpack.c.l.b16 %v1180
    %v1553 = vunpack.c.h.b16 %v1180
    %v1554 = vunpack.c.l.b16 %v1181
    %v1555 = vunpack.c.l.b16 %v1182
    %v1556 = vunpack.c.h.b16 %v1182
    %v1557 = vunpack.c.l.b16 %v1183
    %v1558 = vunpack.c.l.b16 %v1184
    %v1559 = vunpack.c.h.b16 %v1184
    %v1560 = vunpack.c.l.b16 %v1185
    %v1561 = vunpack.c.l.b16 %v1186
    %v1562 = vunpack.c.h.b16 %v1186
    %v1563 = vunpack.c.l.b16 %v1187
    %v1564 = vunpack.c.l.b16 %v1188
    %v1565 = vunpack.c.h.b16 %v1188
    %v1566 = vunpack.c.l.b16 %v1189
    %v1567 = vunpack.c.l.b16 %v1190
    %v1568 = vunpack.c.h.b16 %v1190
    %v1569 = vunpack.c.l.b16 %v1191
    %v1570 = vunpack.c.l.b16 %v1192
    %v1571 = vunpack.c.h.b16 %v1192
    %v1572 = vunpack.c.l.b16 %v1193
    %v1573 = vunpack.c.l.b16 %v1194
    %v1574 = vunpack.c.h.b16 %v1194
    %v1575 = vunpack.c.l.b16 %v1195
    %v1576 = vunpack.c.l.b16 %v1196
    %v1577 = vunpack.c.h.b16 %v1196
    %v1578 = vunpack.c.l.b16 %v1197
    %v1579 = vunpack.c.l.b16 %v1198
    %v1580 = vunpack.c.h.b16 %v1198
    %v1581 = vunpack.c.l.b16 %v1199
    %v1582 = vunpack.c.l.b16 %v1200
    %v1583 = vunpack.c.h.b16 %v1200
    %v1584 = vunpack.c.l.b16 %v1201
    %v1585 = vunpack.c.l.b16 %v1202
    %v1586 = vunpack.c.h.b16 %v1202
    %v1587 = vunpack.c.l.b16 %v1203
    %v1588 = vunpack.c.l.b16 %v1204
    %v1589 = vunpack.c.h.b16 %v1204
    %v1590 = vunpack.c.l.b16 %v1205
    %v1591 = vunpack.c.l.b16 %v1206
    %v1592 = vunpack.c.h.b16 %v1206
    %v1593 = vunpack.c.l.b16 %v1207
    %v1594 = vunpack.c.l.b16 %v1208
    %v1595 = vunpack.c.h.b16 %v1208
    %v1596 = vunpack.c.l.b16 %v1209
    %v1597 = vunpack.c.l.b16 %v1210
    %v1598 = vunpack.c.h.b16 %v1210
    %v1599 = vunpack.c.l.b16 %v1211
    %v1600 = vunpack.c.l.b16 %v1212
    %v1601 = vunpack.c.h.b16 %v1212
    %v1602 = vunpack.c.l.b16 %v1213
    %v1603 = vunpack.c.l.b16 %v1214
    %v1604 = vunpack.c.h.b16 %v1214
    %v1605 = vunpack.c.l.b16 %v1215
    %v1606 = vunpack.c.l.b16 %v1216
    %v1607 = vunpack.c.h.b16 %v1216
    %v1608 = vunpack.c.l.b16 %v1217
    %v1609 = vunpack.c.l.b16 %v1218
    %v1610 = vunpack.c.h.b16 %v1218
    %v1611 = vunpack.c.l.b16 %v1219
    %v1612 = vunpack.c.l.b16 %v1220
    %v1613 = vunpack.c.h.b16 %v1220
    %v1614 = vunpack.c.l.b16 %v1221
    %v1615 = vunpack.c.l.b16 %v1222
    %v1616 = vunpack.c.h.b16 %v1222
    %v1617 = vunpack.c.l.b16 %v1223
    %v1618 = vunpack.c.l.b16 %v1224
    %v1619 = vunpack.c.h.b16 %v1224
    %v1620 = vunpack.c.l.b16 %v1225
    %v1621 = vunpack.c.l.b16 %v1226
    %v1622 = vunpack.c.h.b16 %v1226
    %v1623 = vunpack.c.l.b16 %v1227
    %v1624 = vunpack.c.l.b16 %v1228
    %v1625 = vunpack.c.h.b16 %v1228
    %v1626 = vunpack.c.l.b16 %v1229
    %v1627 = vunpack.c.l.b16 %v1230
    %v1628 = vunpack.c.h.b16 %v1230
    %v1629 = vunpack.c.l.b16 %v1231
    %v1630 = vunpack.c.l.b16 %v1232
    %v1631 = vunpack.c.h.b16 %v1232
    %v1632 = vunpack.c.l.b16 %v1233
    %v1633 = vunpack.c.l.b16 %v1234
    %v1634 = vunpack.c.h.b16 %v1234
    %v1635 = vunpack.c.l.b16 %v1235
    %v1636 = vunpack.c.l.b16 %v1236
    %v1637 = vunpack.c.h.b16 %v1236
    %v1638 = vunpack.c.l.b16 %v1237
    %v1639 = vunpack.c.l.b16 %v1238
    %v1640 = vunpack.c.h.b16 %v1238
    %v1641 = vunpack.c.l.b16 %v1239
    %v1642 = vunpack.c.l.b16 %v1240
    %v1643 = vunpack.c.h.b16 %v1240
    %v1644 = vunpack.c.l.b16 %v1241
    %v1645 = vunpack.c.l.b16 %v1242
    %v1646 = vunpack.c.h.b16 %v1242
    %v1647 = vunpack.c.l.b16 %v1243
    %v1648 = vunpack.c.l.b16 %v1244
    %v1649 = vunpack.c.h.b16 %v1244
    %v1650 = vunpack.c.l.b16 %v1245
    %v1651 = vunpack.c.l.b16 %v1246
    %v1652 = vunpack.c.h.b16 %v1246
    %v1653 = vunpack.c.l.b16 %v1247
    %v1654 = vunpack.c.l.b16 %v1248
    %v1655 = vunpack.c.h.b16 %v1248
    %v1656 = vunpack.c.l.b16 %v1249
    %v1657 = vunpack.c.l.b16 %v1250
    %v1658 = vunpack.c.h.b16 %v1250
    %v1659 = vunpack.c.l.b16 %v1251
    %v1660 = vunpack.c.l.b16 %v1252
    %v1661 = vunpack.c.h.b16 %v1252
    %v1662 = vunpack.c.l.b16 %v1253
    %v1663 = vunpack.c.l.b16 %v1254
    %v1664 = vunpack.c.h.b16 %v1254
    %v1665 = vunpack.c.l.b16 %v1255
    %v1666 = vunpack.c.l.b16 %v1256
    %v1667 = vunpack.c.h.b16 %v1256
    %v1668 = vunpack.c.l.b16 %v1257
    %v1669 = vunpack.c.l.b16 %v1258
    %v1670 = vunpack.c.h.b16 %v1258
    %v1671 = vunpack.c.l.b16 %v1259
    %v1672 = vunpack.c.l.b16 %v1260
    %v1673 = vunpack.c.h.b16 %v1260
    %v1674 = vunpack.c.l.b16 %v1261
    %v1675 = vunpack.c.l.b16 %v1262
    %v1676 = vunpack.c.h.b16 %v1262
    %v1677 = vunpack.c.l.b16 %v1263
    %v1678 = vunpack.c.l.b16 %v1264
    %v1679 = vunpack.c.h.b16 %v1264
    %v1680 = vunpack.c.l.b16 %v1265
    %v1681 = vunpack.c.l.b16 %v1266
    %v1682 = vunpack.c.h.b16 %v1266
    %v1683 = vunpack.c.l.b16 %v1267
    %v1684 = vunpack.c.l.b16 %v1268
    %v1685 = vunpack.c.h.b16 %v1268
    %v1686 = vunpack.c.l.b16 %v1269
    %v1687 = vunpack.c.l.b16 %v1270
    %v1688 = vunpack.c.h.b16 %v1270
    %v1689 = vunpack.c.l.b16 %v1271
    %v1690 = vunpack.c.l.b16 %v1272
    %v1691 = vunpack.c.h.b16 %v1272
    %v1692 = vunpack.c.l.b16 %v1273
    %v1693 = vunpack.c.l.b16 %v1274
    %v1694 = vunpack.c.h.b16 %v1274
    %v1695 = vunpack.c.l.b16 %v1275
    %v1696 = vunpack.c.l.b16 %v1276
    %v1697 = vunpack.c.h.b16 %v1276
    %v1698 = vunpack.c.l.b16 %v1277
    %v1699 = vunpack.c.l.b16 %v1278
    %v1700 = vunpack.c.h.b16 %v1278
    %v1701 = vunpack.c.l.b16 %v1279
    %v1702 = vunpack.c.l.b16 %v1280
    %v1703 = vunpack.c.h.b16 %v1280
    %v1704 = vunpack.c.l.b16 %v1281
    %v1705 = vunpack.c.l.b16 %v1282
    %v1706 = vunpack.c.h.b16 %v1282
    %v1707 = vunpack.c.l.b16 %v1283
    %v1708 = vunpack.c.l.b16 %v1284
    %v1709 = vunpack.c.h.b16 %v1284
    %v1710 = vunpack.c.l.b16 %v1285
    %v1711 = vunpack.c.l.b16 %v1286
    %v1712 = vunpack.c.h.b16 %v1286
    %v1713 = vunpack.c.l.b16 %v1287
    %v1714 = vunpack.c.l.b16 %v1288
    %v1715 = vunpack.c.h.b16 %v1288
    %v1716 = vunpack.c.l.b16 %v1289
    %v1717 = vunpack.c.l.b16 %v1290
    %v1718 = vunpack.c.h.b16 %v1290
    %v1719 = vunpack.c.l.b16 %v1291
    %v1720 = vunpack.c.l.b16 %v1292
    %v1721 = vunpack.c.h.b16 %v1292
    %v1722 = vunpack.c.l.b16 %v1293
    %v1723 = vunpack.c.l.b16 %v1294
    %v1724 = vunpack.c.h.b16 %v1294
    %v1725 = vunpack.c.l.b16 %v1295
    %v1726 = vunpack.c.l.b16 %v1296
    %v1727 = vunpack.c.h.b16 %v1296
    %v1728 = vunpack.c.l.b16 %v1297
    %v1729 = vunpack.c.l.b16 %v1298
    %v1730 = vunpack.c.h.b16 %v1298
    %v1731 = vunpack.c.l.b16 %v1299
    %v1732 = vunpack.c.l.b16 %v1300
    %v1733 = vunpack.c.h.b16 %v1300
    %v1734 = vunpack.c.l.b16 %v1301
    %v1735 = vunpack.c.l.b16 %v1302
    %v1736 = vunpack.c.h.b16 %v1302
    %v1737 = vunpack.c.l.b16 %v1303
    %v1738 = vunpack.c.l.b16 %v1304
    %v1739 = vunpack.c.h.b16 %v1304
    %v1740 = vunpack.c.l.b16 %v1305
    %v1741 = vunpack.c.l.b16 %v1306
    %v1742 = vunpack.c.h.b16 %v1306
    %v1743 = vunpack.c.l.b16 %v1307
    %v1744 = vunpack.c.l.b16 %v1308
    %v1745 = vunpack.c.h.b16 %v1308
    %v1746 = vunpack.c.l.b16 %v1309
    %v1747 = vunpack.c.l.b16 %v1310
    %v1748 = vunpack.c.h.b16 %v1310
    %v1749 = vunpack.c.l.b16 %v1311
    %v1750 = vunpack.c.l.b16 %v1312
    %v1751 = vunpack.c.h.b16 %v1312
    %v1752 = vunpack.c.l.b16 %v1313
    %v1753 = vunpack.c.l.b16 %v1314
    %v1754 = vunpack.c.h.b16 %v1314
    %v1755 = vunpack.c.l.b16 %v1315
    %v1756 = vunpack.c.l.b16 %v1316
    %v1757 = vunpack.c.h.b16 %v1316
    %v1758 = vunpack.c.l.b16 %v1317
    %v1759 = vunpack.c.l.b16 %v1318
    %v1760 = vunpack.c.h.b16 %v1318
    %v1761 = vunpack.c.l.b16 %v1319
    %v1762 = vunpack.c.l.b16 %v1320
    %v1763 = vunpack.c.h.b16 %v1320
    %v1764 = vunpack.c.l.b16 %v1321
    %v1765 = vunpack.c.l.b16 %v1322
    %v1766 = vunpack.c.h.b16 %v1322
    %v1767 = vunpack.c.l.b16 %v1323
    %v1768 = vunpack.c.l.b16 %v1324
    %v1769 = vunpack.c.h.b16 %v1324
    %v1770 = vunpack.c.l.b16 %v1325
    %v1771 = vunpack.c.l.b16 %v1326
    %v1772 = vunpack.c.h.b16 %v1326
    %v1773 = vunpack.c.l.b16 %v1327
    %v1774 = vunpack.c.l.b16 %v1328
    %v1775 = vunpack.c.h.b16 %v1328
    %v1776 = vunpack.c.l.b16 %v1329
    %v1777 = vunpack.c.l.b16 %v1330
    %v1778 = vunpack.c.h.b16 %v1330
    %v1779 = vunpack.c.l.b16 %v1331
    %v1780 = vpack.c.b16 %v1519, %v1516
    %v1781 = vpack.c.b16 %v1520, %v1517
    %v1782 = vpack.c.b16 %v1521, %v1518
    %v1783 = vpack.c.b16 %v1525, %v1522
    %v1784 = vpack.c.b16 %v1526, %v1523
    %v1785 = vpack.c.b16 %v1527, %v1524
    %v1786 = vpack.c.b16 %v1531, %v1528
    %v1787 = vpack.c.b16 %v1532, %v1529
    %v1788 = vpack.c.b16 %v1533, %v1530
    %v1789 = vpack.c.b16 %v1537, %v1534
    %v1790 = vpack.c.b16 %v1538, %v1535
    %v1791 = vpack.c.b16 %v1539, %v1536
    %v1792 = vpack.c.b16 %v1543, %v1540
    %v1793 = vpack.c.b16 %v1544, %v1541
    %v1794 = vpack.c.b16 %v1545, %v1542
    %v1795 = vpack.c.b16 %v1549, %v1546
    %v1796 = vpack.c.b16 %v1550, %v1547
    %v1797 = vpack.c.b16 %v1551, %v1548
    %v1798 = vpack.c.b16 %v1555, %v1552
    %v1799 = vpack.c.b16 %v1556, %v1553
    %v1800 = vpack.c.b16 %v1557, %v1554
    %v1801 = vpack.c.b16 %v1561, %v1558
    %v1802 = vpack.c.b16 %v1562, %v1559
    %v1803 = vpack.c.b16 %v1563, %v1560
    %v1804 = vpack.c.b16 %v1567, %v1564
    %v1805 = vpack.c.b16 %v1568, %v1565
    %v1806 = vpack.c.b16 %v1569, %v1566
    %v1807 = vpack.c.b16 %v1573, %v1570
    %v1808 = vpack.c.b16 %v1574, %v1571
    %v1809 = vpack.c.b16 %v1575, %v1572
    %v1810 = vpack.c.b16 %v1579, %v1576
    %v1811 = vpack.c.b16 %v1580, %v1577
    %v1812 = vpack.c.b16 %v1581, %v1578
    %v1813 = vpack.c.b16 %v1585, %v1582
    %v1814 = vpack.c.b16 %v1586, %v1583
    %v1815 = vpack.c.b16 %v1587, %v1584
    %v1816 = vpack.c.b16 %v1591, %v1588
    %v1817 = vpack.c.b16 %v1592, %v1589
    %v1818 = vpack.c.b16 %v1593, %v1590
    %v1819 = vpack.c.b16 %v1597, %v1594
    %v1820 = vpack.c.b16 %v1598, %v1595
    %v1821 = vpack.c.b16 %v1599, %v1596
    %v1822 = vpack.c.b16 %v1603, %v1600
    %v1823 = vpack.c.b16 %v1604, %v1601
    %v1824 = vpack.c.b16 %v1605, %v1602
    %v1825 = vpack.c.b16 %v1609, %v1606
    %v1826 = vpack.c.b16 %v1610, %v1607
    %v1827 = vpack.c.b16 %v1611, %v1608
    %v1828 = vpack.c.b16 %v1615, %v1612
    %v1829 = vpack.c.b16 %v1616, %v1613
    %v1830 = vpack.c.b16 %v1617, %v1614
    %v1831 = vpack.c.b16 %v1621, %v1618
    %v1832 = vpack.c.b16 %v1622, %v1619
    %v1833 = vpack.c.b16 %v1623, %v1620
    %v1834 = vpack.c.b16 %v1627, %v1624
    %v1835 = vpack.c.b16 %v1628, %v1625
    %v1836 = vpack.c.b16 %v1629, %v1626
    %v1837 = vpack.c.b16 %v1633, %v1630
    %v1838 = vpack.c.b16 %v1634, %v1631
    %v1839 = vpack.c.b16 %v1635, %v1632
    %v1840 = vpack.c.b16 %v1639, %v1636
    %v1841 = vpack.c.b16 %v1640, %v1637
    %v1842 = vpack.c.b16 %v1641, %v1638
    %v1843 = vpack.c.b16 %v1645, %v1642
    %v1844 = vpack.c.b16 %v1646, %v1643
    %v1845 = vpack.c.b16 %v1647, %v1644
    %v1846 = vpack.c.b16 %v1651, %v1648
    %v1847 = vpack.c.b16 %v1652, %v1649
    %v1848 = vpack.c.b16 %v1653, %v1650
    %v1849 = vpack.c.b16 %v1657, %v1654
    %v1850 = vpack.c.b16 %v1658, %v1655
    %v1851 = vpack.c.b16 %v1659, %v1656
    %v1852 = vpack.c.b16 %v1663, %v1660
    %v1853 = vpack.c.b16 %v1664, %v1661
    %v1854 = vpack.c.b16 %v1665, %v1662
    %v1855 = vpack.c.b16 %v1669, %v1666
    %v1856 = vpack.c.b16 %v1670, %v1667
    %v1857 = vpack.c.b16 %v1671, %v1668
    %v1858 = vpack.c.b16 %v1675, %v1672
    %v1859 = vpack.c.b16 %v1676, %v1673
    %v1860 = vpack.c.b16 %v1677, %v1674
    %v1861 = vpack.c.b16 %v1681, %v1678
    %v1862 = vpack.c.b16 %v1682, %v1679
    %v1863 = vpack.c.b16 %v1683, %v1680
    %v1864 = vpack.c.b16 %v1687, %v1684
    %v1865 = vpack.c.b16 %v1688, %v1685
    %v1866 = vpack.c.b16 %v1689, %v1686
    %v1867 = vpack.c.b16 %v1693, %v1690
    %v1868 = vpack.c.b16 %v1694, %v1691
    %v1869 = vpack.c.b16 %v1695, %v1692
    %v1870 = vpack.c.b16 %v1699, %v1696
    %v1871 = vpack.c.b16 %v1700, %v1697
    %v1872 = vpack.c.b16 %v1701, %v1698
    %v1873 = vpack.c.b16 %v1705, %v1702
    %v1874 = vpack.c.b16 %v1706, %v1703
    %v1875 = vpack.c.b16 %v1707, %v1704
    %v1876 = vpack.c.b16 %v1711, %v1708
    %v1877 = vpack.c.b16 %v1712, %v1709
    %v1878 = vpack.c.b16 %v1713, %v1710
    %v1879 = vpack.c.b16 %v1717, %v1714
    %v1880 = vpack.c.b16 %v1718, %v1715
    %v1881 = vpack.c.b16 %v1719, %v1716
    %v1882 = vpack.c.b16 %v1723, %v1720
    %v1883 = vpack.c.b16 %v1724, %v1721
    %v1884 = vpack.c.b16 %v1725, %v1722
    %v1885 = vpack.c.b16 %v1729, %v1726
    %v1886 = vpack.c.b16 %v1730, %v1727
    %v1887 = vpack.c.b16 %v1731, %v1728
    %v1888 = vpack.c.b16 %v1735, %v1732
    %v1889 = vpack.c.b16 %v1736, %v1733
    %v1890 = vpack.c.b16 %v1737, %v1734
    %v1891 = vpack.c.b16 %v1741, %v1738
    %v1892 = vpack.c.b16 %v1742, %v1739
    %v1893 = vpack.c.b16 %v1743, %v1740
    %v1894 = vpack.c.b16 %v1747, %v1744
    %v1895 = vpack.c.b16 %v1748, %v1745
    %v1896 = vpack.c.b16 %v1749, %v1746
    %v1897 = vpack.c.b16 %v1753, %v1750
    %v1898 = vpack.c.b16 %v1754, %v1751
    %v1899 = vpack.c.b16 %v1755, %v1752
    %v1900 = vpack.c.b16 %v1759, %v1756
    %v1901 = vpack.c.b16 %v1760, %v1757
    %v1902 = vpack.c.b16 %v1761, %v1758
    %v1903 = vpack.c.b16 %v1765, %v1762
    %v1904 = vpack.c.b16 %v1766, %v1763
    %v1905 = vpack.c.b16 %v1767, %v1764
    %v1906 = vpack.c.b16 %v1771, %v1768
    %v1907 = vpack.c.b16 %v1772, %v1769
    %v1908 = vpack.c.b16 %v1773, %v1770
    %v1909 = vpack.c.b16 %v1777, %v1774
    %v1910 = vpack.c.b16 %v1778, %v1775
    %v1911 = vpack.c.b16 %v1779, %v1776
    %vm2044 = vcmask 523264
    %v2046 = vsel %vm2044, %v1155, 0
    %2048 = vmatpush.bf16.msra.mxu0 %v1801
    %2049 = vmatpush.bf16.msra.mxu0 %v1798
    %2050 = vmatpush.bf16.msra.mxu0 %v1795
    %2051 = vmatpush.bf16.msra.mxu0 %v1792
    %2052 = vmatpush.bf16.msra.mxu0 %v1789
    %2053 = vmatpush.bf16.msra.mxu0 %v1786
    %2054 = vmatpush.bf16.msra.mxu0 %v1783
    %2055 = vmatpush.bf16.msra.mxu0 %v1780
    %2056 = vmatmul.bf16.gmra.mxu0 %v1150
    %v2057 = vpop.f32.mrf.mxu0
    %v2058 = vadd.f32 %v1334, %v2057
    %v2059 = vpop.f32.mrf.mxu0
    %2060 = vdwg.mxu0
    %2061 = vmatpush.bf16.msra.mxu0 %v1825
    %2062 = vmatpush.bf16.msra.mxu0 %v1822
    %2063 = vmatpush.bf16.msra.mxu0 %v1819
    %2064 = vmatpush.bf16.msra.mxu0 %v1816
    %2065 = vmatpush.bf16.msra.mxu0 %v1813
    %2066 = vmatpush.bf16.msra.mxu0 %v1810
    %2067 = vmatpush.bf16.msra.mxu0 %v1807
    %2068 = vmatpush.bf16.msra.mxu0 %v1804
    %2069 = vmatmul.bf16.gmra.mxu0 %v1151
    %v2070 = vpop.f32.mrf.mxu0
    %v2071 = vadd.f32 %v2058, %v2070
    %v2072 = vpop.f32.mrf.mxu0
    %2073 = vdwg.mxu0
    %2074 = vmatpush.bf16.msra.mxu0 %v1849
    %2075 = vmatpush.bf16.msra.mxu0 %v1846
    %2076 = vmatpush.bf16.msra.mxu0 %v1843
    %2077 = vmatpush.bf16.msra.mxu0 %v1840
    %2078 = vmatpush.bf16.msra.mxu0 %v1837
    %2079 = vmatpush.bf16.msra.mxu0 %v1834
    %2080 = vmatpush.bf16.msra.mxu0 %v1831
    %2081 = vmatpush.bf16.msra.mxu0 %v1828
    %2082 = vmatmul.bf16.gmra.mxu0 %v1152
    %v2083 = vpop.f32.mrf.mxu0
    %v2084 = vadd.f32 %v2071, %v2083
    %v2085 = vpop.f32.mrf.mxu0
    %2086 = vdwg.mxu0
    %2087 = vmatpush.bf16.msra.mxu0 %v1873
    %2088 = vmatpush.bf16.msra.mxu0 %v1870
    %2089 = vmatpush.bf16.msra.mxu0 %v1867
    %2090 = vmatpush.bf16.msra.mxu0 %v1864
    %2091 = vmatpush.bf16.msra.mxu0 %v1861
    %2092 = vmatpush.bf16.msra.mxu0 %v1858
    %2093 = vmatpush.bf16.msra.mxu0 %v1855
    %2094 = vmatpush.bf16.msra.mxu0 %v1852
    %2095 = vmatmul.bf16.gmra.mxu0 %v1153
    %v2096 = vpop.f32.mrf.mxu0
    %v2097 = vadd.f32 %v2084, %v2096
    %v2098 = vpop.f32.mrf.mxu0
    %2099 = vdwg.mxu0
    %2100 = vmatpush.bf16.msra.mxu0 %v1897
    %2101 = vmatpush.bf16.msra.mxu0 %v1894
    %2102 = vmatpush.bf16.msra.mxu0 %v1891
    %2103 = vmatpush.bf16.msra.mxu0 %v1888
    %2104 = vmatpush.bf16.msra.mxu0 %v1885
    %2105 = vmatpush.bf16.msra.mxu0 %v1882
    %2106 = vmatpush.bf16.msra.mxu0 %v1879
    %2107 = vmatpush.bf16.msra.mxu0 %v1876
    %2108 = vmatmul.bf16.gmra.mxu0 %v1154
    %v2109 = vpop.f32.mrf.mxu0
    %v2110 = vadd.f32 %v2097, %v2109
    %v2111 = vpop.f32.mrf.mxu0
    %2112 = vdwg.mxu0
    %2113 = vmatpush.bf16.msra.mxu0 0
    %2114 = vmatpush.bf16.msra.mxu0 0
    %2115 = vmatpush.bf16.msra.mxu0 0
    %2116 = vmatpush.bf16.msra.mxu0 0
    %2117 = vmatpush.bf16.msra.mxu0 %v1909
    %2118 = vmatpush.bf16.msra.mxu0 %v1906
    %2119 = vmatpush.bf16.msra.mxu0 %v1903
    %2120 = vmatpush.bf16.msra.mxu0 %v1900
    %2121 = vmatmul.bf16.gmra.mxu0 %v2046
    %v2122 = vpop.f32.mrf.mxu0
    %v2123 = vadd.f32 %v2110, %v2122
    %v2124 = vpop.f32.mrf.mxu0
    %2125 = vdwg.mxu0
    %2126 = vmatpush.bf16.msra.mxu0 %v1802
    %2127 = vmatpush.bf16.msra.mxu0 %v1799
    %2128 = vmatpush.bf16.msra.mxu0 %v1796
    %2129 = vmatpush.bf16.msra.mxu0 %v1793
    %2130 = vmatpush.bf16.msra.mxu0 %v1790
    %2131 = vmatpush.bf16.msra.mxu0 %v1787
    %2132 = vmatpush.bf16.msra.mxu0 %v1784
    %2133 = vmatpush.bf16.msra.mxu0 %v1781
    %2134 = vmatmul.bf16.gmra.mxu0 %v1150
    %v2135 = vpop.f32.mrf.mxu0
    %v2136 = vadd.f32 %v1335, %v2135
    %v2137 = vpop.f32.mrf.mxu0
    %2138 = vdwg.mxu0
    %2139 = vmatpush.bf16.msra.mxu0 %v1826
    %2140 = vmatpush.bf16.msra.mxu0 %v1823
    %2141 = vmatpush.bf16.msra.mxu0 %v1820
    %2142 = vmatpush.bf16.msra.mxu0 %v1817
    %2143 = vmatpush.bf16.msra.mxu0 %v1814
    %2144 = vmatpush.bf16.msra.mxu0 %v1811
    %2145 = vmatpush.bf16.msra.mxu0 %v1808
    %2146 = vmatpush.bf16.msra.mxu0 %v1805
    %2147 = vmatmul.bf16.gmra.mxu0 %v1151
    %v2148 = vpop.f32.mrf.mxu0
    %v2149 = vadd.f32 %v2136, %v2148
    %v2150 = vpop.f32.mrf.mxu0
    %2151 = vdwg.mxu0
    %2152 = vmatpush.bf16.msra.mxu0 %v1850
    %2153 = vmatpush.bf16.msra.mxu0 %v1847
    %2154 = vmatpush.bf16.msra.mxu0 %v1844
    %2155 = vmatpush.bf16.msra.mxu0 %v1841
    %2156 = vmatpush.bf16.msra.mxu0 %v1838
    %2157 = vmatpush.bf16.msra.mxu0 %v1835
    %2158 = vmatpush.bf16.msra.mxu0 %v1832
    %2159 = vmatpush.bf16.msra.mxu0 %v1829
    %2160 = vmatmul.bf16.gmra.mxu0 %v1152
    %v2161 = vpop.f32.mrf.mxu0
    %v2162 = vadd.f32 %v2149, %v2161
    %v2163 = vpop.f32.mrf.mxu0
    %2164 = vdwg.mxu0
    %2165 = vmatpush.bf16.msra.mxu0 %v1874
    %2166 = vmatpush.bf16.msra.mxu0 %v1871
    %2167 = vmatpush.bf16.msra.mxu0 %v1868
    %2168 = vmatpush.bf16.msra.mxu0 %v1865
    %2169 = vmatpush.bf16.msra.mxu0 %v1862
    %2170 = vmatpush.bf16.msra.mxu0 %v1859
    %2171 = vmatpush.bf16.msra.mxu0 %v1856
    %2172 = vmatpush.bf16.msra.mxu0 %v1853
    %2173 = vmatmul.bf16.gmra.mxu0 %v1153
    %v2174 = vpop.f32.mrf.mxu0
    %v2175 = vadd.f32 %v2162, %v2174
    %v2176 = vpop.f32.mrf.mxu0
    %2177 = vdwg.mxu0
    %2178 = vmatpush.bf16.msra.mxu0 %v1898
    %2179 = vmatpush.bf16.msra.mxu0 %v1895
    %2180 = vmatpush.bf16.msra.mxu0 %v1892
    %2181 = vmatpush.bf16.msra.mxu0 %v1889
    %2182 = vmatpush.bf16.msra.mxu0 %v1886
    %2183 = vmatpush.bf16.msra.mxu0 %v1883
    %2184 = vmatpush.bf16.msra.mxu0 %v1880
    %2185 = vmatpush.bf16.msra.mxu0 %v1877
    %2186 = vmatmul.bf16.gmra.mxu0 %v1154
    %v2187 = vpop.f32.mrf.mxu0
    %v2188 = vadd.f32 %v2175, %v2187
    %v2189 = vpop.f32.mrf.mxu0
    %2190 = vdwg.mxu0
    %2191 = vmatpush.bf16.msra.mxu0 0
    %2192 = vmatpush.bf16.msra.mxu0 0
    %2193 = vmatpush.bf16.msra.mxu0 0
    %2194 = vmatpush.bf16.msra.mxu0 0
    %2195 = vmatpush.bf16.msra.mxu0 %v1910
    %2196 = vmatpush.bf16.msra.mxu0 %v1907
    %2197 = vmatpush.bf16.msra.mxu0 %v1904
    %2198 = vmatpush.bf16.msra.mxu0 %v1901
    %2199 = vmatmul.bf16.gmra.mxu0 %v2046
    %v2200 = vpop.f32.mrf.mxu0
    %v2201 = vadd.f32 %v2188, %v2200
    %v2202 = vpop.f32.mrf.mxu0
    %2203 = vdwg.mxu0
    %2204 = vmatpush.bf16.msra.mxu0 %v1803
    %2205 = vmatpush.bf16.msra.mxu0 %v1800
    %2206 = vmatpush.bf16.msra.mxu0 %v1797
    %2207 = vmatpush.bf16.msra.mxu0 %v1794
    %2208 = vmatpush.bf16.msra.mxu0 %v1791
    %2209 = vmatpush.bf16.msra.mxu0 %v1788
    %2210 = vmatpush.bf16.msra.mxu0 %v1785
    %2211 = vmatpush.bf16.msra.mxu0 %v1782
    %2212 = vmatmul.bf16.gmra.mxu0 %v1150
    %v2213 = vpop.f32.mrf.mxu0
    %v2214 = vadd.f32 %v1336, %v2213
    %v2215 = vpop.f32.mrf.mxu0
    %2216 = vdwg.mxu0
    %2217 = vmatpush.bf16.msra.mxu0 %v1827
    %2218 = vmatpush.bf16.msra.mxu0 %v1824
    %2219 = vmatpush.bf16.msra.mxu0 %v1821
    %2220 = vmatpush.bf16.msra.mxu0 %v1818
    %2221 = vmatpush.bf16.msra.mxu0 %v1815
    %2222 = vmatpush.bf16.msra.mxu0 %v1812
    %2223 = vmatpush.bf16.msra.mxu0 %v1809
    %2224 = vmatpush.bf16.msra.mxu0 %v1806
    %2225 = vmatmul.bf16.gmra.mxu0 %v1151
    %v2226 = vpop.f32.mrf.mxu0
    %v2227 = vadd.f32 %v2214, %v2226
    %v2228 = vpop.f32.mrf.mxu0
    %2229 = vdwg.mxu0
    %2230 = vmatpush.bf16.msra.mxu0 %v1851
    %2231 = vmatpush.bf16.msra.mxu0 %v1848
    %2232 = vmatpush.bf16.msra.mxu0 %v1845
    %2233 = vmatpush.bf16.msra.mxu0 %v1842
    %2234 = vmatpush.bf16.msra.mxu0 %v1839
    %2235 = vmatpush.bf16.msra.mxu0 %v1836
    %2236 = vmatpush.bf16.msra.mxu0 %v1833
    %2237 = vmatpush.bf16.msra.mxu0 %v1830
    %2238 = vmatmul.bf16.gmra.mxu0 %v1152
    %v2239 = vpop.f32.mrf.mxu0
    %v2240 = vadd.f32 %v2227, %v2239
    %v2241 = vpop.f32.mrf.mxu0
    %2242 = vdwg.mxu0
    %2243 = vmatpush.bf16.msra.mxu0 %v1875
    %2244 = vmatpush.bf16.msra.mxu0 %v1872
    %2245 = vmatpush.bf16.msra.mxu0 %v1869
    %2246 = vmatpush.bf16.msra.mxu0 %v1866
    %2247 = vmatpush.bf16.msra.mxu0 %v1863
    %2248 = vmatpush.bf16.msra.mxu0 %v1860
    %2249 = vmatpush.bf16.msra.mxu0 %v1857
    %2250 = vmatpush.bf16.msra.mxu0 %v1854
    %2251 = vmatmul.bf16.gmra.mxu0 %v1153
    %v2252 = vpop.f32.mrf.mxu0
    %v2253 = vadd.f32 %v2240, %v2252
    %v2254 = vpop.f32.mrf.mxu0
    %2255 = vdwg.mxu0
    %2256 = vmatpush.bf16.msra.mxu0 %v1899
    %2257 = vmatpush.bf16.msra.mxu0 %v1896
    %2258 = vmatpush.bf16.msra.mxu0 %v1893
    %2259 = vmatpush.bf16.msra.mxu0 %v1890
    %2260 = vmatpush.bf16.msra.mxu0 %v1887
    %2261 = vmatpush.bf16.msra.mxu0 %v1884
    %2262 = vmatpush.bf16.msra.mxu0 %v1881
    %2263 = vmatpush.bf16.msra.mxu0 %v1878
    %2264 = vmatmul.bf16.gmra.mxu0 %v1154
    %v2265 = vpop.f32.mrf.mxu0
    %v2266 = vadd.f32 %v2253, %v2265
    %v2267 = vpop.f32.mrf.mxu0
    %2268 = vdwg.mxu0
    %2269 = vmatpush.bf16.msra.mxu0 0
    %2270 = vmatpush.bf16.msra.mxu0 0
    %2271 = vmatpush.bf16.msra.mxu0 0
    %2272 = vmatpush.bf16.msra.mxu0 0
    %2273 = vmatpush.bf16.msra.mxu0 %v1911
    %2274 = vmatpush.bf16.msra.mxu0 %v1908
    %2275 = vmatpush.bf16.msra.mxu0 %v1905
    %2276 = vmatpush.bf16.msra.mxu0 %v1902
    %2277 = vmatmul.bf16.gmra.mxu0 %v2046
    %v2278 = vpop.f32.mrf.mxu0
    %v2279 = vadd.f32 %v2266, %v2278
    %v2280 = vpop.f32.mrf.mxu0
    %2281 = vdwg.mxu0
    %v2282 = vmax.f32 %v2123, 0.0
    %v2283 = vmax.f32 %v2201, 0.0
    %v2284 = vmax.f32 %v2279, 0.0
    %v2285 = vld [vmem:[%s5] sm:$0x7]
    %v2287 = vperm.slane %v2285, 0
    %v2288 = vperm.slane %v2285, 1
    %v2289 = vperm.slane %v2285, 2
    %v2293 = vmul.f32 %v2282, %v2287
    %v2294 = vmul.f32 %v2283, %v2288
    %v2295 = vmul.f32 %v2284, %v2289
    %v2296 = vadd.f32 %v2293, %v2294
    %v2297 = vsel %vm906, %v2295, 0.0
    %v2298 = vadd.f32 %v2296, %v2297
    %2299 = vadd.xlane.f32.xlu0 %v2298
    %v2300 = vpop.xlane.xlu0 %2299
    %v2301 = vld [vmem:[#allocation2] sm:$0x1]
    %v2303 = vperm.slane %v2301, 0
    %v2305 = vadd.f32 %v2300, %v2303
    %vm2306 = vcmask 7168
    %2307 = vst.msk [vmem:[%s7] sm:$0xff] %vm2306, %v2305
    // Predicated region
    $region46: #{tpu_custom_call.1} parent=1 // pred_check
      _
    $region47: #{tpu_custom_call.1} parent=1 // pred_check_branch
      %2309 = sbr.rel (0) target = $region49
    $region48: #{tpu_custom_call.1} parent=1 // pred_region
      _
    $region49: #{tpu_custom_call.1} parent=1 // pred_fallthru
      _
    // Predicated region
    $region50: #{tpu_custom_call.1} parent=1 // pred_check
      _
    $region51: #{tpu_custom_call.1} parent=1 // pred_check_branch
      %2311 = sbr.rel (0) target = $region53
    $region52: #{tpu_custom_call.1} parent=1 // pred_region
      _
    $region53: #{tpu_custom_call.1} parent=1 // pred_fallthru
      _
    %2312 = vsyncpa [#allocation4], 1
    %2313 = vsyncpa [#allocation6], 1
    %2314 = vsyncpa [#allocation9], 1

</llo_original>
